<compile_context>
chip_gen: v5e
topology: v5e:2x2
jax: 0.10.0
libtpu: 0.0.40
codegen_flags: <defaults>
</compile_context>

<pallas_src>
from functools import partial

import jax
import jax.numpy as jnp
from jax import lax
from jax.experimental import pallas as pl
from jax.experimental.pallas import tpu as pltpu


def _make_basic_block_kernel(H, W, Cin, Cout, Cpad, stride, has_projection):
    # output spatial size of a 3x3 / pad-1 / stride-s conv (== 1x1 / pad-0 / stride-s)
    Hout = (H + 2 - 3) // stride + 1
    Wout = (W + 2 - 3) // stride + 1
    M = Hout * Wout

    def _row(k):  # rows of the padded input feeding tap row-offset k
        return pl.ds(k, Hout) if stride == 1 else pl.ds(k, Hout, stride)

    def _col(k):
        return pl.ds(k, Wout) if stride == 1 else pl.ds(k, Wout, stride)

    def kernel(xp_ref, w1_ref, w2_ref, o_ref):
        # xp_ref: (H+2, W+2, Cin) f32   -- one zero-padded image (batch dim squeezed)
        # w1_ref: (9*Cin, Cout) bf16            im2col conv1 weight
        # w2_ref: (9*Cout [+ Cin], Cpad) bf16   im2col conv2 weight (+ fused 1x1 shortcut)
        # o_ref : (Hout, Wout, Cpad) f32        lane-dense (channel-padded) output

        # ---- conv1: single im2col matmul, bf16 operands / f32 accumulation ----
        cols1 = [xp_ref[_row(kh), _col(kw), :].reshape(M, Cin).astype(jnp.bfloat16)
                 for kh in range(3) for kw in range(3)]
        im1 = jnp.concatenate(cols1, axis=-1)                           # (M, 9*Cin) bf16
        acc1 = jnp.dot(im1, w1_ref[...], preferred_element_type=jnp.float32)
        # ReLU in f32, then drop to bf16 (conv2 operands are bf16 anyway).
        out1 = jnp.maximum(acc1, 0.0).astype(jnp.bfloat16).reshape(Hout, Wout, Cout)

        # ---- zero-pad conv1 output by 1 pixel at value level (bf16, no scratch) ----
        zr = jnp.zeros((1, Wout, Cout), jnp.bfloat16)
        zc = jnp.zeros((Hout + 2, 1, Cout), jnp.bfloat16)
        p = jnp.concatenate([zr, out1, zr], axis=0)                     # (Hout+2, Wout,   Cout)
        p = jnp.concatenate([zc, p, zc], axis=1)                        # (Hout+2, Wout+2, Cout)

        # ---- conv2 (+ fused 1x1 projection shortcut): single im2col matmul ----
        cols2 = [p[kh:kh + Hout, kw:kw + Wout, :].reshape(M, Cout)
                 for kh in range(3) for kw in range(3)]
        if has_projection:
            # center tap of the padded input == the strided 1x1-conv input; reuse it
            cols2.append(cols1[4])
        im2 = jnp.concatenate(cols2, axis=-1)                           # (M, 9*Cout [+ Cin]) bf16
        acc2 = jnp.dot(im2, w2_ref[...], preferred_element_type=jnp.float32)  # (M, Cpad)

        if not has_projection:
            # identity shortcut (Cin == Cout, stride == 1): plain f32 add, no MXU
            res = xp_ref[_row(1), _col(1), :].reshape(M, Cin).astype(jnp.float32)
            if Cpad > Cout:
                res = jnp.concatenate(
                    [res, jnp.zeros((M, Cpad - Cout), jnp.float32)], axis=-1)
            acc2 = acc2 + res

        out = jnp.maximum(acc2, 0.0)                                    # residual add + ReLU (f32)
        o_ref[...] = out.reshape(Hout, Wout, Cpad).astype(o_ref.dtype)

    return kernel, Hout, Wout


@partial(jax.jit, static_argnames=("stride",))
def basic_block_pallas(x_nchw, w1_oihw, w2_oihw, ws_oihw, stride=1):
    """x_nchw: (N, Cin, H, W); weights in PyTorch OIHW layout. ws_oihw=None -> identity."""
    N, Cin, H, W = x_nchw.shape
    Cout = w1_oihw.shape[0]
    has_projection = ws_oihw is not None

    # lane-dense output: pad channel dim up to a multiple of 128
    Cpad = ((Cout + 127) // 128) * 128

    # NCHW -> NHWC, spatial pad-by-1 done on host; compute stays in the kernel
    x = jnp.transpose(x_nchw, (0, 2, 3, 1))
    xp = jnp.pad(x, ((0, 0), (1, 1), (1, 1), (0, 0)))

    # conv1 weight: OIHW -> (9*Cin, Cout), bf16
    w1c = jnp.transpose(w1_oihw, (2, 3, 1, 0)).reshape(9 * Cin, Cout).astype(jnp.bfloat16)

    # conv2 weight: OIHW -> (9*Cout, Cout); fold projection shortcut in as extra K rows;
    # zero-pad the output-channel dim to Cpad for lane-dense stores.
    w2_r = jnp.transpose(w2_oihw, (2, 3, 1, 0)).reshape(9 * Cout, Cout)
    if has_projection:
        ws_r = jnp.transpose(ws_oihw, (2, 3, 1, 0)).reshape(Cin, Cout)
        w2_r = jnp.concatenate([w2_r, ws_r], axis=0)                    # (9*Cout + Cin, Cout)
    K2 = w2_r.shape[0]
    w2c = jnp.zeros((K2, Cpad), jnp.float32).at[:, :Cout].set(w2_r).astype(jnp.bfloat16)

    kernel, Hout, Wout = _make_basic_block_kernel(
        H, W, Cin, Cout, Cpad, stride, has_projection)

    out_pad = pl.pallas_call(
        kernel,
        out_shape=jax.ShapeDtypeStruct((N, Hout, Wout, Cpad), x.dtype),
        grid_spec=pltpu.PrefetchScalarGridSpec(
            num_scalar_prefetch=0,
            grid=(N,),
            in_specs=[
                pl.BlockSpec((None, H + 2, W + 2, Cin), lambda n: (n, 0, 0, 0)),
                pl.BlockSpec((9 * Cin, Cout), lambda n: (0, 0)),
                pl.BlockSpec((K2, Cpad), lambda n: (0, 0)),
            ],
            out_specs=pl.BlockSpec((None, Hout, Wout, Cpad), lambda n: (n, 0, 0, 0)),
        ),
        compiler_params=pltpu.CompilerParams(dimension_semantics=("parallel",)),
    )(xp, w1c, w2c)

    # drop channel padding, back to NCHW
    return jnp.transpose(out_pad[..., :Cout], (0, 3, 1, 2))


def basic_block_ref(x, w1, w2, ws, stride):
    """Pure-JAX reference (lax convs), NCHW/OIHW, for correctness checking."""
    dn = lax.conv_dimension_numbers(x.shape, w1.shape, ("NCHW", "OIHW", "NCHW"))
    out = lax.conv_general_dilated(x, w1, (stride, stride), ((1, 1), (1, 1)),
                                   dimension_numbers=dn)
    out = jnp.maximum(out, 0.0)
    dn2 = lax.conv_dimension_numbers(out.shape, w2.shape, ("NCHW", "OIHW", "NCHW"))
    out = lax.conv_general_dilated(out, w2, (1, 1), ((1, 1), (1, 1)),
                                   dimension_numbers=dn2)
    if ws is None:
        sc = x
    else:
        dns = lax.conv_dimension_numbers(x.shape, ws.shape, ("NCHW", "OIHW", "NCHW"))
        sc = lax.conv_general_dilated(x, ws, (stride, stride), ((0, 0), (0, 0)),
                                      dimension_numbers=dns)
    return jnp.maximum(out + sc, 0.0)


if __name__ == "__main__":
    key = jax.random.PRNGKey(0)

    # ---- case 1: BasicBlock(in=4, out=8, stride=1) -> projection (1x1) shortcut ----
    N, Cin, Cout, H, W, stride = 2, 4, 8, 16, 16, 1
    kx, k1, k2, ks, k3, k4, k5 = jax.random.split(key, 7)
    x = jax.random.normal(kx, (N, Cin, H, W), jnp.float32)
    w1 = 0.1 * jax.random.normal(k1, (Cout, Cin, 3, 3), jnp.float32)   # conv1 weight
    w2 = 0.1 * jax.random.normal(k2, (Cout, Cout, 3, 3), jnp.float32)  # conv2 weight
    ws = 0.1 * jax.random.normal(ks, (Cout, Cin, 1, 1), jnp.float32)   # shortcut 1x1 weight

    out = jax.block_until_ready(basic_block_pallas(x, w1, w2, ws, stride=stride))
    ref = jax.block_until_ready(basic_block_ref(x, w1, w2, ws, stride))
    assert out.shape == ref.shape == (N, Cout, H, W)
    # matmul operands are bf16 (f32 accumulation) -> loosened tolerance vs f32 lax ref
    assert jnp.allclose(out, ref, atol=2e-2, rtol=2e-2), "mismatch vs lax reference (projection)"

    # ---- case 2: BasicBlock(in=8, out=8, stride=1) -> identity shortcut ----
    C2 = 8
    x2 = jax.random.normal(k3, (N, C2, H, W), jnp.float32)
    w1b = 0.1 * jax.random.normal(k4, (C2, C2, 3, 3), jnp.float32)
    w2b = 0.1 * jax.random.normal(k5, (C2, C2, 3, 3), jnp.float32)

    out2 = jax.block_until_ready(basic_block_pallas(x2, w1b, w2b, None, stride=1))
    ref2 = jax.block_until_ready(basic_block_ref(x2, w1b, w2b, None, 1))
    assert out2.shape == ref2.shape == (N, C2, H, W)
    assert jnp.allclose(out2, ref2, atol=2e-2, rtol=2e-2), "mismatch vs lax reference (identity)"

    print("KERNEL_OK")
</pallas_src>

<mosaic_0001>
module attributes {stable_mosaic.version = 11 : i64} {
  func.func @kernel(%arg0: i32, %arg1: memref<1x18x18x4xf32, #tpu.memory_space<vmem>>, %arg2: memref<36x8xbf16, #tpu.memory_space<vmem>>, %arg3: memref<76x128xbf16, #tpu.memory_space<vmem>>, %arg4: memref<1x16x16x128xf32, #tpu.memory_space<vmem>>) attributes {dimension_semantics = [#tpu.dimension_semantics<parallel>], iteration_bounds = array<i64: 2>, scalar_prefetch = 0 : i64, scratch_operands = 0 : i64, tpu.core_type = #tpu.core_type<tc>, window_params = [{transform_indices = @transform_0, window_bounds = array<i64: 1, 18, 18, 4>}, {pipeline_mode = #tpu.pipeline_mode<synchronous>, transform_indices = @transform_1, window_bounds = array<i64: 36, 8>}, {pipeline_mode = #tpu.pipeline_mode<synchronous>, transform_indices = @transform_2, window_bounds = array<i64: 76, 128>}, {transform_indices = @transform_3, window_bounds = array<i64: 1, 16, 16, 128>}]} {
    %c0 = arith.constant 0 : index
    %c0_0 = arith.constant 0 : index
    %c0_1 = arith.constant 0 : index
    %c0_2 = arith.constant 0 : index
    %0 = vector.load %arg1[%c0, %c0_0, %c0_1, %c0_2] : memref<1x18x18x4xf32, #tpu.memory_space<vmem>>, vector<1x16x16x4xf32>
    %1 = vector.shape_cast %0 : vector<1x16x16x4xf32> to vector<16x16x4xf32>
    %2 = vector.shape_cast %1 : vector<16x16x4xf32> to vector<256x4xf32>
    %3 = arith.truncf %2 : vector<256x4xf32> to vector<256x4xbf16>
    %c0_3 = arith.constant 0 : index
    %c0_4 = arith.constant 0 : index
    %c1 = arith.constant 1 : index
    %c0_5 = arith.constant 0 : index
    %4 = vector.load %arg1[%c0_3, %c0_4, %c1, %c0_5] : memref<1x18x18x4xf32, #tpu.memory_space<vmem>>, vector<1x16x16x4xf32>
    %5 = vector.shape_cast %4 : vector<1x16x16x4xf32> to vector<16x16x4xf32>
    %6 = vector.shape_cast %5 : vector<16x16x4xf32> to vector<256x4xf32>
    %7 = arith.truncf %6 : vector<256x4xf32> to vector<256x4xbf16>
    %c0_6 = arith.constant 0 : index
    %c0_7 = arith.constant 0 : index
    %c2 = arith.constant 2 : index
    %c0_8 = arith.constant 0 : index
    %8 = vector.load %arg1[%c0_6, %c0_7, %c2, %c0_8] : memref<1x18x18x4xf32, #tpu.memory_space<vmem>>, vector<1x16x16x4xf32>
    %9 = vector.shape_cast %8 : vector<1x16x16x4xf32> to vector<16x16x4xf32>
    %10 = vector.shape_cast %9 : vector<16x16x4xf32> to vector<256x4xf32>
    %11 = arith.truncf %10 : vector<256x4xf32> to vector<256x4xbf16>
    %c0_9 = arith.constant 0 : index
    %c1_10 = arith.constant 1 : index
    %c0_11 = arith.constant 0 : index
    %c0_12 = arith.constant 0 : index
    %12 = vector.load %arg1[%c0_9, %c1_10, %c0_11, %c0_12] : memref<1x18x18x4xf32, #tpu.memory_space<vmem>>, vector<1x16x16x4xf32>
    %13 = vector.shape_cast %12 : vector<1x16x16x4xf32> to vector<16x16x4xf32>
    %14 = vector.shape_cast %13 : vector<16x16x4xf32> to vector<256x4xf32>
    %15 = arith.truncf %14 : vector<256x4xf32> to vector<256x4xbf16>
    %c0_13 = arith.constant 0 : index
    %c1_14 = arith.constant 1 : index
    %c1_15 = arith.constant 1 : index
    %c0_16 = arith.constant 0 : index
    %16 = vector.load %arg1[%c0_13, %c1_14, %c1_15, %c0_16] : memref<1x18x18x4xf32, #tpu.memory_space<vmem>>, vector<1x16x16x4xf32>
    %17 = vector.shape_cast %16 : vector<1x16x16x4xf32> to vector<16x16x4xf32>
    %18 = vector.shape_cast %17 : vector<16x16x4xf32> to vector<256x4xf32>
    %19 = arith.truncf %18 : vector<256x4xf32> to vector<256x4xbf16>
    %c0_17 = arith.constant 0 : index
    %c1_18 = arith.constant 1 : index
    %c2_19 = arith.constant 2 : index
    %c0_20 = arith.constant 0 : index
    %20 = vector.load %arg1[%c0_17, %c1_18, %c2_19, %c0_20] : memref<1x18x18x4xf32, #tpu.memory_space<vmem>>, vector<1x16x16x4xf32>
    %21 = vector.shape_cast %20 : vector<1x16x16x4xf32> to vector<16x16x4xf32>
    %22 = vector.shape_cast %21 : vector<16x16x4xf32> to vector<256x4xf32>
    %23 = arith.truncf %22 : vector<256x4xf32> to vector<256x4xbf16>
    %c0_21 = arith.constant 0 : index
    %c2_22 = arith.constant 2 : index
    %c0_23 = arith.constant 0 : index
    %c0_24 = arith.constant 0 : index
    %24 = vector.load %arg1[%c0_21, %c2_22, %c0_23, %c0_24] : memref<1x18x18x4xf32, #tpu.memory_space<vmem>>, vector<1x16x16x4xf32>
    %25 = vector.shape_cast %24 : vector<1x16x16x4xf32> to vector<16x16x4xf32>
    %26 = vector.shape_cast %25 : vector<16x16x4xf32> to vector<256x4xf32>
    %27 = arith.truncf %26 : vector<256x4xf32> to vector<256x4xbf16>
    %c0_25 = arith.constant 0 : index
    %c2_26 = arith.constant 2 : index
    %c1_27 = arith.constant 1 : index
    %c0_28 = arith.constant 0 : index
    %28 = vector.load %arg1[%c0_25, %c2_26, %c1_27, %c0_28] : memref<1x18x18x4xf32, #tpu.memory_space<vmem>>, vector<1x16x16x4xf32>
    %29 = vector.shape_cast %28 : vector<1x16x16x4xf32> to vector<16x16x4xf32>
    %30 = vector.shape_cast %29 : vector<16x16x4xf32> to vector<256x4xf32>
    %31 = arith.truncf %30 : vector<256x4xf32> to vector<256x4xbf16>
    %c0_29 = arith.constant 0 : index
    %c2_30 = arith.constant 2 : index
    %c2_31 = arith.constant 2 : index
    %c0_32 = arith.constant 0 : index
    %32 = vector.load %arg1[%c0_29, %c2_30, %c2_31, %c0_32] : memref<1x18x18x4xf32, #tpu.memory_space<vmem>>, vector<1x16x16x4xf32>
    %33 = vector.shape_cast %32 : vector<1x16x16x4xf32> to vector<16x16x4xf32>
    %34 = vector.shape_cast %33 : vector<16x16x4xf32> to vector<256x4xf32>
    %35 = arith.truncf %34 : vector<256x4xf32> to vector<256x4xbf16>
    %36 = tpu.concatenate %3, %7, %11, %15, %19, %23, %27, %31, %35 in 1 : vector<256x4xbf16>, vector<256x4xbf16>, vector<256x4xbf16>, vector<256x4xbf16>, vector<256x4xbf16>, vector<256x4xbf16>, vector<256x4xbf16>, vector<256x4xbf16>, vector<256x4xbf16> -> vector<256x36xbf16>
    %c0_33 = arith.constant 0 : index
    %c0_34 = arith.constant 0 : index
    %37 = vector.load %arg2[%c0_33, %c0_34] : memref<36x8xbf16, #tpu.memory_space<vmem>>, vector<36x8xbf16>
    %cst = arith.constant dense<0.000000e+00> : vector<256x8xf32>
    %38 = tpu.matmul %36, %37, %cst {dimension_numbers = #tpu.dot_dimension_numbers<[1], [0], [0], [1], [0, 0, 1, 1], [], []>} : vector<256x36xbf16>, vector<36x8xbf16>, vector<256x8xf32> -> vector<256x8xf32>
    %cst_35 = arith.constant 0.000000e+00 : f32
    %39 = vector.broadcast %cst_35 : f32 to vector<256x8xf32>
    %40 = arith.maximumf %38, %39 : vector<256x8xf32>
    %41 = arith.truncf %40 : vector<256x8xf32> to vector<256x8xbf16>
    %42 = vector.shape_cast %41 : vector<256x8xbf16> to vector<16x16x8xbf16>
    %cst_36 = arith.constant 0.000000e+00 : bf16
    %43 = vector.broadcast %cst_36 : bf16 to vector<1x16x8xbf16>
    %cst_37 = arith.constant 0.000000e+00 : bf16
    %44 = vector.broadcast %cst_37 : bf16 to vector<18x1x8xbf16>
    %45 = tpu.concatenate %43, %42, %43 in 0 : vector<1x16x8xbf16>, vector<16x16x8xbf16>, vector<1x16x8xbf16> -> vector<18x16x8xbf16>
    %46 = tpu.concatenate %44, %45, %44 in 1 : vector<18x1x8xbf16>, vector<18x16x8xbf16>, vector<18x1x8xbf16> -> vector<18x18x8xbf16>
    %47 = vector.extract_strided_slice %46 {offsets = [0, 0, 0], sizes = [16, 16, 8], strides = [1, 1, 1]} : vector<18x18x8xbf16> to vector<16x16x8xbf16>
    %48 = vector.shape_cast %47 : vector<16x16x8xbf16> to vector<256x8xbf16>
    %49 = vector.extract_strided_slice %46 {offsets = [0, 1, 0], sizes = [16, 16, 8], strides = [1, 1, 1]} : vector<18x18x8xbf16> to vector<16x16x8xbf16>
    %50 = vector.shape_cast %49 : vector<16x16x8xbf16> to vector<256x8xbf16>
    %51 = vector.extract_strided_slice %46 {offsets = [0, 2, 0], sizes = [16, 16, 8], strides = [1, 1, 1]} : vector<18x18x8xbf16> to vector<16x16x8xbf16>
    %52 = vector.shape_cast %51 : vector<16x16x8xbf16> to vector<256x8xbf16>
    %53 = vector.extract_strided_slice %46 {offsets = [1, 0, 0], sizes = [16, 16, 8], strides = [1, 1, 1]} : vector<18x18x8xbf16> to vector<16x16x8xbf16>
    %54 = vector.shape_cast %53 : vector<16x16x8xbf16> to vector<256x8xbf16>
    %55 = vector.extract_strided_slice %46 {offsets = [1, 1, 0], sizes = [16, 16, 8], strides = [1, 1, 1]} : vector<18x18x8xbf16> to vector<16x16x8xbf16>
    %56 = vector.shape_cast %55 : vector<16x16x8xbf16> to vector<256x8xbf16>
    %57 = vector.extract_strided_slice %46 {offsets = [1, 2, 0], sizes = [16, 16, 8], strides = [1, 1, 1]} : vector<18x18x8xbf16> to vector<16x16x8xbf16>
    %58 = vector.shape_cast %57 : vector<16x16x8xbf16> to vector<256x8xbf16>
    %59 = vector.extract_strided_slice %46 {offsets = [2, 0, 0], sizes = [16, 16, 8], strides = [1, 1, 1]} : vector<18x18x8xbf16> to vector<16x16x8xbf16>
    %60 = vector.shape_cast %59 : vector<16x16x8xbf16> to vector<256x8xbf16>
    %61 = vector.extract_strided_slice %46 {offsets = [2, 1, 0], sizes = [16, 16, 8], strides = [1, 1, 1]} : vector<18x18x8xbf16> to vector<16x16x8xbf16>
    %62 = vector.shape_cast %61 : vector<16x16x8xbf16> to vector<256x8xbf16>
    %63 = vector.extract_strided_slice %46 {offsets = [2, 2, 0], sizes = [16, 16, 8], strides = [1, 1, 1]} : vector<18x18x8xbf16> to vector<16x16x8xbf16>
    %64 = vector.shape_cast %63 : vector<16x16x8xbf16> to vector<256x8xbf16>
    %65 = tpu.concatenate %48, %50, %52, %54, %56, %58, %60, %62, %64, %19 in 1 : vector<256x8xbf16>, vector<256x8xbf16>, vector<256x8xbf16>, vector<256x8xbf16>, vector<256x8xbf16>, vector<256x8xbf16>, vector<256x8xbf16>, vector<256x8xbf16>, vector<256x8xbf16>, vector<256x4xbf16> -> vector<256x76xbf16>
    %c0_38 = arith.constant 0 : index
    %c0_39 = arith.constant 0 : index
    %66 = vector.load %arg3[%c0_38, %c0_39] : memref<76x128xbf16, #tpu.memory_space<vmem>>, vector<76x128xbf16>
    %cst_40 = arith.constant dense<0.000000e+00> : vector<256x128xf32>
    %67 = tpu.matmul %65, %66, %cst_40 {dimension_numbers = #tpu.dot_dimension_numbers<[1], [0], [0], [1], [0, 0, 1, 1], [], []>} : vector<256x76xbf16>, vector<76x128xbf16>, vector<256x128xf32> -> vector<256x128xf32>
    %cst_41 = arith.constant 0.000000e+00 : f32
    %68 = vector.broadcast %cst_41 : f32 to vector<256x128xf32>
    %69 = arith.maximumf %67, %68 : vector<256x128xf32>
    %70 = vector.shape_cast %69 : vector<256x128xf32> to vector<16x16x128xf32>
    %c0_42 = arith.constant 0 : index
    %c0_43 = arith.constant 0 : index
    %c0_44 = arith.constant 0 : index
    %c0_45 = arith.constant 0 : index
    %71 = vector.load %arg4[%c0_42, %c0_43, %c0_44, %c0_45] : memref<1x16x16x128xf32, #tpu.memory_space<vmem>>, vector<1x16x16x128xf32>
    %72 = vector.shape_cast %71 : vector<1x16x16x128xf32> to vector<16x16x128xf32>
    %73 = vector.shape_cast %70 : vector<16x16x128xf32> to vector<1x16x16x128xf32>
    tpu.vector_store %arg4[%c0_42, %c0_43, %c0_44, %c0_45], %73 {strides = array<i32>} : memref<1x16x16x128xf32, #tpu.memory_space<vmem>>, vector<1x16x16x128xf32>,
    return
  }
  func.func @transform_0(%arg0: i32) -> (i32, i32, i32, i32) {
    %c0_i32 = arith.constant 0 : i32
    %c0_i32_0 = arith.constant 0 : i32
    %c0_i32_1 = arith.constant 0 : i32
    %c0_i32_2 = arith.constant 0 : i32
    return %arg0, %c0_i32, %c0_i32_0, %c0_i32_1 : i32, i32, i32, i32
  }
  func.func @transform_1(%arg0: i32) -> (i32, i32) {
    %c0_i32 = arith.constant 0 : i32
    %c0_i32_0 = arith.constant 0 : i32
    %c0_i32_1 = arith.constant 0 : i32
    return %c0_i32, %c0_i32_0 : i32, i32
  }
  func.func @transform_2(%arg0: i32) -> (i32, i32) {
    %c0_i32 = arith.constant 0 : i32
    %c0_i32_0 = arith.constant 0 : i32
    %c0_i32_1 = arith.constant 0 : i32
    return %c0_i32, %c0_i32_0 : i32, i32
  }
  func.func @transform_3(%arg0: i32) -> (i32, i32, i32, i32) {
    %c0_i32 = arith.constant 0 : i32
    %c0_i32_0 = arith.constant 0 : i32
    %c0_i32_1 = arith.constant 0 : i32
    %c0_i32_2 = arith.constant 0 : i32
    return %arg0, %c0_i32, %c0_i32_0, %c0_i32_1 : i32, i32, i32, i32
  }
}

</mosaic_0001>

<llo_original>
// kernel: basic_block_pallas.1
$region0: #{basic_block_pallas.1}
  #allocation0 [shape = 'u32[]', space=smem, size = 0x4, offset = 0x4, fixed_abs, tag = 'smem constant byte address 0x4 - core index']
  #allocation1 [shape = 'u32[72,128]{1,0:T(1,128)}', space=vmem, size = 0x9000, scoped, tag = 'internal scratch']
  %s0 = inlined_call_operand.vmem [shape: f32[2,18,18,4], index: 0, kind: input, shape index: {}]
  %s1 = inlined_call_operand.vmem [shape: bf16[36,8], index: 1, kind: input, shape index: {}]
  %s2 = inlined_call_operand.vmem [shape: bf16[76,128], index: 2, kind: input, shape index: {}]
  %s3 = inlined_call_operand.vmem [shape: f32[2,16,16,128], index: 3, kind: output, shape index: {}]
  %s4 = sld [smem:[#allocation0]]
  $region45: #{basic_block_pallas.1} parent=0
    _
  %s6 = ssub.s32 1, %s4
  %s7 = scalar_select 0, %s6, %s4
  loop: start=0, step=1, limit=4
  $region2: #{basic_block_pallas.1} parent=0 // loop_pre_header
    _
  $region3: #{basic_block_pallas.1} parent=0 // loop_header
    %s9 = sphi 0, %s13
    %p10 = scmp.ge.s32.totalorder %s9, 4
    %s19 = sphi 0, %s21
    %s22 = sphi 0, %s19
    %s23 = sphi 0, %s22
    %s39 = sphi 0, %s23
    %s43 = sphi 0, %s43
    %s45 = sphi 0, %s43
    %s46 = sphi 0, %s45
    %s60 = sphi 0, %s46
    %s64 = sphi 0, %s64
    %s66 = sphi 0, %s64
    %s67 = sphi 0, %s66
    %s81 = sphi 0, %s67
    %s87 = sphi 0, %s89
    %s90 = sphi 0, %s87
    %s91 = sphi 0, %s90
    %s107 = sphi 0, %s91
  $region4: #{basic_block_pallas.1} parent=0 // loop_header_branch
    %12 = sbr.rel (%p10) target = $region8
  $region5: #{basic_block_pallas.1} parent=0 // loop_body
    %s14 = ssub.s32 %s9, 1
    %s15 = ssub.s32 %s9, 2
    %s16 = sadd.s32 %s9, 1
    %s17 = ssub.s32 %s9, %s16
    %p18 = scmp.eq.s32.totalorder %s17, 0
    %s20 = sadd.s32 %s19, 1
    %s21 = scalar_select %p18, %s19, %s20
    %p24 = pneg %p18
    %p25 = scmp.eq.s32.totalorder %s9, 1
    %p26 = por %p24, %p25
    %p27 = scmp.ne.s32.totalorder %s19, %s22
    %p28 = scmp.eq.s32.totalorder %s9, 0
    %p29 = por %p27, %p28
    %p30 = scmp.ne.s32.totalorder %s19, %s22
    %p31 = scmp.eq.s32.totalorder %s14, 1
    %p32 = por %p30, %p31
    %p33 = scmp.ne.s32.totalorder %s22, %s23
    %p34 = scmp.eq.s32.totalorder %s14, 0
    %p35 = por %p33, %p34
    %p36 = scmp.ne.s32.totalorder %s22, %s23
    %p37 = scmp.eq.s32.totalorder %s15, 1
    %p38 = por %p36, %p37
    %p40 = scmp.ne.s32.totalorder %s23, %s39
    %p41 = scmp.eq.s32.totalorder %s15, 0
    %p42 = por %p40, %p41
    %s44 = sadd.s32 %s43, 1
    %p47 = scmp.eq.s32.totalorder %s9, 1
    %p48 = scmp.ne.s32.totalorder %s43, %s45
    %p49 = scmp.eq.s32.totalorder %s9, 0
    %p50 = por %p48, %p49
    %p51 = scmp.ne.s32.totalorder %s43, %s45
    %p52 = scmp.eq.s32.totalorder %s14, 1
    %p53 = por %p51, %p52
    %p54 = scmp.ne.s32.totalorder %s45, %s46
    %p55 = scmp.eq.s32.totalorder %s14, 0
    %p56 = por %p54, %p55
    %p57 = scmp.ne.s32.totalorder %s45, %s46
    %p58 = scmp.eq.s32.totalorder %s15, 1
    %p59 = por %p57, %p58
    %p61 = scmp.ne.s32.totalorder %s46, %s60
    %p62 = scmp.eq.s32.totalorder %s15, 0
    %p63 = por %p61, %p62
    %s65 = sadd.s32 %s64, 1
    %p68 = scmp.eq.s32.totalorder %s9, 1
    %p69 = scmp.ne.s32.totalorder %s64, %s66
    %p70 = scmp.eq.s32.totalorder %s9, 0
    %p71 = por %p69, %p70
    %p72 = scmp.ne.s32.totalorder %s64, %s66
    %p73 = scmp.eq.s32.totalorder %s14, 1
    %p74 = por %p72, %p73
    %p75 = scmp.ne.s32.totalorder %s66, %s67
    %p76 = scmp.eq.s32.totalorder %s14, 0
    %p77 = por %p75, %p76
    %p78 = scmp.ne.s32.totalorder %s66, %s67
    %p79 = scmp.eq.s32.totalorder %s15, 1
    %p80 = por %p78, %p79
    %p82 = scmp.ne.s32.totalorder %s67, %s81
    %p83 = scmp.eq.s32.totalorder %s15, 0
    %p84 = por %p82, %p83
    %s85 = ssub.s32 %s9, %s16
    %p86 = scmp.eq.s32.totalorder %s85, 0
    %s88 = sadd.s32 %s87, 1
    %s89 = scalar_select %p86, %s87, %s88
    %p92 = pneg %p86
    %p93 = scmp.eq.s32.totalorder %s9, 1
    %p94 = por %p92, %p93
    %p95 = scmp.ne.s32.totalorder %s87, %s90
    %p96 = scmp.eq.s32.totalorder %s9, 0
    %p97 = por %p95, %p96
    %p98 = scmp.ne.s32.totalorder %s87, %s90
    %p99 = scmp.eq.s32.totalorder %s14, 1
    %p100 = por %p98, %p99
    %p101 = scmp.ne.s32.totalorder %s90, %s91
    %p102 = scmp.eq.s32.totalorder %s14, 0
    %p103 = por %p101, %p102
    %p104 = scmp.ne.s32.totalorder %s90, %s91
    %p105 = scmp.eq.s32.totalorder %s15, 1
    %p106 = por %p104, %p105
    %p108 = scmp.ne.s32.totalorder %s91, %s107
    %p109 = scmp.eq.s32.totalorder %s15, 0
    %p110 = por %p108, %p109
    %p111 = scmp.le.s32.totalorder 1, %s9
    %p112 = scmp.lt.s32.totalorder %s9, 3
    %p113 = pnand %p111, %p112
    %p114 = pneg %p113
    // Predicated region
    $region9: #{basic_block_pallas.1} parent=5 // pred_check
      _
    $region10: #{basic_block_pallas.1} parent=5 // pred_check_branch
      %116 = sbr.rel (%p113) target = $region12
    $region11: #{basic_block_pallas.1} parent=5 // pred_region
      %s117 = ssub.s32 %s9, 1
      // Predicated region
      $region13: #{basic_block_pallas.1} parent=11 // pred_check
        %p118 = pneg %p56
      $region14: #{basic_block_pallas.1} parent=11 // pred_check_branch
        %120 = sbr.rel (%p118) target = $region16
      $region15: #{basic_block_pallas.1} parent=11 // pred_region
        _
      $region16: #{basic_block_pallas.1} parent=11 // pred_fallthru
        _
      // Predicated region
      $region17: #{basic_block_pallas.1} parent=11 // pred_check
        %p121 = pneg %p77
      $region18: #{basic_block_pallas.1} parent=11 // pred_check_branch
        %123 = sbr.rel (%p121) target = $region20
      $region19: #{basic_block_pallas.1} parent=11 // pred_region
        _
      $region20: #{basic_block_pallas.1} parent=11 // pred_fallthru
        _
    $region12: #{basic_block_pallas.1} parent=5 // pred_fallthru
      _
    %p124 = scmp.lt.s32.totalorder %s9, 2
    // Predicated region
    $region21: #{basic_block_pallas.1} parent=5 // pred_check
      %p125 = pneg %p124
    $region22: #{basic_block_pallas.1} parent=5 // pred_check_branch
      %127 = sbr.rel (%p125) target = $region24
    $region23: #{basic_block_pallas.1} parent=5 // pred_region
      // Predicated region
      $region25: #{basic_block_pallas.1} parent=23 // pred_check
        %p128 = pneg %p29
      $region26: #{basic_block_pallas.1} parent=23 // pred_check_branch
        %130 = sbr.rel (%p128) target = $region28
      $region27: #{basic_block_pallas.1} parent=23 // pred_region
        %p131 = scmp.lt.s32.totalorder %s9, 1
        %s132 = scalar_select %p131, %s9, 1
        %s133 = smul.addr %s132, 54
        %s134 = smul.addr %s133, 8
        %s135 = scalar_lea.vmem %s0, %s134
      $region28: #{basic_block_pallas.1} parent=23 // pred_fallthru
        _
    $region24: #{basic_block_pallas.1} parent=5 // pred_fallthru
      _
    %p136 = scmp.le.s32.totalorder 1, %s9
    %p137 = scmp.lt.s32.totalorder %s9, 3
    %p138 = pnand %p136, %p137
    %p139 = pneg %p138
    // Predicated region
    $region29: #{basic_block_pallas.1} parent=5 // pred_check
      _
    $region30: #{basic_block_pallas.1} parent=5 // pred_check_branch
      %141 = sbr.rel (%p138) target = $region32
    $region31: #{basic_block_pallas.1} parent=5 // pred_region
      %s142 = ssub.s32 %s9, 1
      %p143 = scmp.lt.s32.totalorder %s14, 1
      %s144 = scalar_select %p143, %s14, 1
      %s145 = smul.addr %s144, 54
      %s146 = smul.addr %s145, 8
      %s147 = scalar_lea.vmem %s0, %s146
      %p148 = pneg %p35
      %p149 = pneg %p32
      %p150 = pneg %p56
      %p151 = pneg %p53
      %p152 = pneg %p77
      %p153 = pneg %p74
      %p154 = pneg %p103
      %p155 = pneg %p100
      %p156 = scmp.lt.s32.totalorder %s14, 1
      %s157 = scalar_select %p156, %s14, 1
      %s158 = smul.addr %s157, 32
      %s159 = smul.addr %s158, 8
      %s160 = scalar_lea.vmem %s3, %s159
      %p161 = scmp.lt.s32.totalorder %s14, 1
      %s162 = scalar_select %p161, %s14, 1
      %s163 = smul.addr %s162, 54
      %s164 = smul.addr %s163, 8
      %s165 = scalar_lea.vmem %s0, %s164
      %p166 = scmp.lt.s32.totalorder %s14, 1
      %s167 = scalar_select %p166, %s14, 1
      %s168 = smul.addr %s167, 32
      %s169 = smul.addr %s168, 8
      %s170 = scalar_lea.vmem %s3, %s169
      %v172 = vld [vmem:[%s165] sm:$0xff]
      %v173 = vld [vmem:[%s165 + $0x8] sm:$0xff]
      %v174 = vld [vmem:[%s165 + $0x18] sm:$0xff]
      %v175 = vld [vmem:[%s165 + $0x20] sm:$0xff]
      %v176 = vld [vmem:[%s165 + $0x30] sm:$0xff]
      %v177 = vld [vmem:[%s165 + $0x38] sm:$0xff]
      %v178 = vld [vmem:[%s165 + $0x48] sm:$0xff]
      %v179 = vld [vmem:[%s165 + $0x50] sm:$0xff]
      %v180 = vld [vmem:[%s165 + $0x60] sm:$0xff]
      %v181 = vld [vmem:[%s165 + $0x68] sm:$0xff]
      %v182 = vld [vmem:[%s165 + $0x78] sm:$0xff]
      %v183 = vld [vmem:[%s165 + $0x80] sm:$0xff]
      %v184 = vld [vmem:[%s165 + $0x90] sm:$0xff]
      %v185 = vld [vmem:[%s165 + $0x98] sm:$0xff]
      %v186 = vld [vmem:[%s165 + $0xa8] sm:$0xff]
      %v187 = vld [vmem:[%s165 + $0xb0] sm:$0xff]
      %v188 = vld [vmem:[%s165 + $0xc0] sm:$0xff]
      %v189 = vld [vmem:[%s165 + $0xc8] sm:$0xff]
      %v190 = vld [vmem:[%s165 + $0xd8] sm:$0xff]
      %v191 = vld [vmem:[%s165 + $0xe0] sm:$0xff]
      %v192 = vld [vmem:[%s165 + $0xf0] sm:$0xff]
      %v193 = vld [vmem:[%s165 + $0xf8] sm:$0xff]
      %v194 = vld [vmem:[%s165 + $0x108] sm:$0xff]
      %v195 = vld [vmem:[%s165 + $0x110] sm:$0xff]
      %v196 = vld [vmem:[%s165 + $0x120] sm:$0xff]
      %v197 = vld [vmem:[%s165 + $0x128] sm:$0xff]
      %v198 = vld [vmem:[%s165 + $0x138] sm:$0xff]
      %v199 = vld [vmem:[%s165 + $0x140] sm:$0xff]
      %v200 = vld [vmem:[%s165 + $0x150] sm:$0xff]
      %v201 = vld [vmem:[%s165 + $0x158] sm:$0xff]
      %v202 = vld [vmem:[%s165 + $0x168] sm:$0xff]
      %v203 = vld [vmem:[%s165 + $0x170] sm:$0xff]
      %v204 = vpack.c.bf16 %v172, %v172
      %v205 = vpack.c.bf16 %v173, %v173
      %v206 = vpack.c.bf16 %v174, %v174
      %v207 = vpack.c.bf16 %v175, %v175
      %v208 = vpack.c.bf16 %v176, %v176
      %v209 = vpack.c.bf16 %v177, %v177
      %v210 = vpack.c.bf16 %v178, %v178
      %v211 = vpack.c.bf16 %v179, %v179
      %v212 = vpack.c.bf16 %v180, %v180
      %v213 = vpack.c.bf16 %v181, %v181
      %v214 = vpack.c.bf16 %v182, %v182
      %v215 = vpack.c.bf16 %v183, %v183
      %v216 = vpack.c.bf16 %v184, %v184
      %v217 = vpack.c.bf16 %v185, %v185
      %v218 = vpack.c.bf16 %v186, %v186
      %v219 = vpack.c.bf16 %v187, %v187
      %v220 = vpack.c.bf16 %v188, %v188
      %v221 = vpack.c.bf16 %v189, %v189
      %v222 = vpack.c.bf16 %v190, %v190
      %v223 = vpack.c.bf16 %v191, %v191
      %v224 = vpack.c.bf16 %v192, %v192
      %v225 = vpack.c.bf16 %v193, %v193
      %v226 = vpack.c.bf16 %v194, %v194
      %v227 = vpack.c.bf16 %v195, %v195
      %v228 = vpack.c.bf16 %v196, %v196
      %v229 = vpack.c.bf16 %v197, %v197
      %v230 = vpack.c.bf16 %v198, %v198
      %v231 = vpack.c.bf16 %v199, %v199
      %v232 = vpack.c.bf16 %v200, %v200
      %v233 = vpack.c.bf16 %v201, %v201
      %v234 = vpack.c.bf16 %v202, %v202
      %v235 = vpack.c.bf16 %v203, %v203
      %v236 = vld [vmem:[%s165 + $0x1] sm:$0xff]
      %v237 = vld [vmem:[%s165 + $0x9] sm:$0xff]
      %v238 = vld [vmem:[%s165 + $0x19] sm:$0xff]
      %v239 = vld [vmem:[%s165 + $0x21] sm:$0xff]
      %v240 = vld [vmem:[%s165 + $0x31] sm:$0xff]
      %v241 = vld [vmem:[%s165 + $0x39] sm:$0xff]
      %v242 = vld [vmem:[%s165 + $0x49] sm:$0xff]
      %v243 = vld [vmem:[%s165 + $0x51] sm:$0xff]
      %v244 = vld [vmem:[%s165 + $0x61] sm:$0xff]
      %v245 = vld [vmem:[%s165 + $0x69] sm:$0xff]
      %v246 = vld [vmem:[%s165 + $0x79] sm:$0xff]
      %v247 = vld [vmem:[%s165 + $0x81] sm:$0xff]
      %v248 = vld [vmem:[%s165 + $0x91] sm:$0xff]
      %v249 = vld [vmem:[%s165 + $0x99] sm:$0xff]
      %v250 = vld [vmem:[%s165 + $0xa9] sm:$0xff]
      %v251 = vld [vmem:[%s165 + $0xb1] sm:$0xff]
      %v252 = vld [vmem:[%s165 + $0xc1] sm:$0xff]
      %v253 = vld [vmem:[%s165 + $0xc9] sm:$0xff]
      %v254 = vld [vmem:[%s165 + $0xd9] sm:$0xff]
      %v255 = vld [vmem:[%s165 + $0xe1] sm:$0xff]
      %v256 = vld [vmem:[%s165 + $0xf1] sm:$0xff]
      %v257 = vld [vmem:[%s165 + $0xf9] sm:$0xff]
      %v258 = vld [vmem:[%s165 + $0x109] sm:$0xff]
      %v259 = vld [vmem:[%s165 + $0x111] sm:$0xff]
      %v260 = vld [vmem:[%s165 + $0x121] sm:$0xff]
      %v261 = vld [vmem:[%s165 + $0x129] sm:$0xff]
      %v262 = vld [vmem:[%s165 + $0x139] sm:$0xff]
      %v263 = vld [vmem:[%s165 + $0x141] sm:$0xff]
      %v264 = vld [vmem:[%s165 + $0x151] sm:$0xff]
      %v265 = vld [vmem:[%s165 + $0x159] sm:$0xff]
      %v266 = vld [vmem:[%s165 + $0x169] sm:$0xff]
      %v267 = vld [vmem:[%s165 + $0x171] sm:$0xff]
      %v268 = vpack.c.bf16 %v236, %v236
      %v269 = vpack.c.bf16 %v237, %v237
      %v270 = vpack.c.bf16 %v238, %v238
      %v271 = vpack.c.bf16 %v239, %v239
      %v272 = vpack.c.bf16 %v240, %v240
      %v273 = vpack.c.bf16 %v241, %v241
      %v274 = vpack.c.bf16 %v242, %v242
      %v275 = vpack.c.bf16 %v243, %v243
      %v276 = vpack.c.bf16 %v244, %v244
      %v277 = vpack.c.bf16 %v245, %v245
      %v278 = vpack.c.bf16 %v246, %v246
      %v279 = vpack.c.bf16 %v247, %v247
      %v280 = vpack.c.bf16 %v248, %v248
      %v281 = vpack.c.bf16 %v249, %v249
      %v282 = vpack.c.bf16 %v250, %v250
      %v283 = vpack.c.bf16 %v251, %v251
      %v284 = vpack.c.bf16 %v252, %v252
      %v285 = vpack.c.bf16 %v253, %v253
      %v286 = vpack.c.bf16 %v254, %v254
      %v287 = vpack.c.bf16 %v255, %v255
      %v288 = vpack.c.bf16 %v256, %v256
      %v289 = vpack.c.bf16 %v257, %v257
      %v290 = vpack.c.bf16 %v258, %v258
      %v291 = vpack.c.bf16 %v259, %v259
      %v292 = vpack.c.bf16 %v260, %v260
      %v293 = vpack.c.bf16 %v261, %v261
      %v294 = vpack.c.bf16 %v262, %v262
      %v295 = vpack.c.bf16 %v263, %v263
      %v296 = vpack.c.bf16 %v264, %v264
      %v297 = vpack.c.bf16 %v265, %v265
      %v298 = vpack.c.bf16 %v266, %v266
      %v299 = vpack.c.bf16 %v267, %v267
      %v300 = vld [vmem:[%s165 + $0x2] sm:$0xff]
      %v301 = vld [vmem:[%s165 + $0xa] sm:$0xff]
      %v302 = vld [vmem:[%s165 + $0x1a] sm:$0xff]
      %v303 = vld [vmem:[%s165 + $0x22] sm:$0xff]
      %v304 = vld [vmem:[%s165 + $0x32] sm:$0xff]
      %v305 = vld [vmem:[%s165 + $0x3a] sm:$0xff]
      %v306 = vld [vmem:[%s165 + $0x4a] sm:$0xff]
      %v307 = vld [vmem:[%s165 + $0x52] sm:$0xff]
      %v308 = vld [vmem:[%s165 + $0x62] sm:$0xff]
      %v309 = vld [vmem:[%s165 + $0x6a] sm:$0xff]
      %v310 = vld [vmem:[%s165 + $0x7a] sm:$0xff]
      %v311 = vld [vmem:[%s165 + $0x82] sm:$0xff]
      %v312 = vld [vmem:[%s165 + $0x92] sm:$0xff]
      %v313 = vld [vmem:[%s165 + $0x9a] sm:$0xff]
      %v314 = vld [vmem:[%s165 + $0xaa] sm:$0xff]
      %v315 = vld [vmem:[%s165 + $0xb2] sm:$0xff]
      %v316 = vld [vmem:[%s165 + $0xc2] sm:$0xff]
      %v317 = vld [vmem:[%s165 + $0xca] sm:$0xff]
      %v318 = vld [vmem:[%s165 + $0xda] sm:$0xff]
      %v319 = vld [vmem:[%s165 + $0xe2] sm:$0xff]
      %v320 = vld [vmem:[%s165 + $0xf2] sm:$0xff]
      %v321 = vld [vmem:[%s165 + $0xfa] sm:$0xff]
      %v322 = vld [vmem:[%s165 + $0x10a] sm:$0xff]
      %v323 = vld [vmem:[%s165 + $0x112] sm:$0xff]
      %v324 = vld [vmem:[%s165 + $0x122] sm:$0xff]
      %v325 = vld [vmem:[%s165 + $0x12a] sm:$0xff]
      %v326 = vld [vmem:[%s165 + $0x13a] sm:$0xff]
      %v327 = vld [vmem:[%s165 + $0x142] sm:$0xff]
      %v328 = vld [vmem:[%s165 + $0x152] sm:$0xff]
      %v329 = vld [vmem:[%s165 + $0x15a] sm:$0xff]
      %v330 = vld [vmem:[%s165 + $0x16a] sm:$0xff]
      %v331 = vld [vmem:[%s165 + $0x172] sm:$0xff]
      %v332 = vpack.c.bf16 %v300, %v300
      %v333 = vpack.c.bf16 %v301, %v301
      %v334 = vpack.c.bf16 %v302, %v302
      %v335 = vpack.c.bf16 %v303, %v303
      %v336 = vpack.c.bf16 %v304, %v304
      %v337 = vpack.c.bf16 %v305, %v305
      %v338 = vpack.c.bf16 %v306, %v306
      %v339 = vpack.c.bf16 %v307, %v307
      %v340 = vpack.c.bf16 %v308, %v308
      %v341 = vpack.c.bf16 %v309, %v309
      %v342 = vpack.c.bf16 %v310, %v310
      %v343 = vpack.c.bf16 %v311, %v311
      %v344 = vpack.c.bf16 %v312, %v312
      %v345 = vpack.c.bf16 %v313, %v313
      %v346 = vpack.c.bf16 %v314, %v314
      %v347 = vpack.c.bf16 %v315, %v315
      %v348 = vpack.c.bf16 %v316, %v316
      %v349 = vpack.c.bf16 %v317, %v317
      %v350 = vpack.c.bf16 %v318, %v318
      %v351 = vpack.c.bf16 %v319, %v319
      %v352 = vpack.c.bf16 %v320, %v320
      %v353 = vpack.c.bf16 %v321, %v321
      %v354 = vpack.c.bf16 %v322, %v322
      %v355 = vpack.c.bf16 %v323, %v323
      %v356 = vpack.c.bf16 %v324, %v324
      %v357 = vpack.c.bf16 %v325, %v325
      %v358 = vpack.c.bf16 %v326, %v326
      %v359 = vpack.c.bf16 %v327, %v327
      %v360 = vpack.c.bf16 %v328, %v328
      %v361 = vpack.c.bf16 %v329, %v329
      %v362 = vpack.c.bf16 %v330, %v330
      %v363 = vpack.c.bf16 %v331, %v331
      %s364 = scalar_lea.vmem %s165, 24
      %v365 = vld [vmem:[%s364] sm:$0xff]
      %v366 = vld [vmem:[%s364 + $0x8] sm:$0xff]
      %v367 = vld [vmem:[%s364 + $0x18] sm:$0xff]
      %v368 = vld [vmem:[%s364 + $0x20] sm:$0xff]
      %v369 = vld [vmem:[%s364 + $0x30] sm:$0xff]
      %v370 = vld [vmem:[%s364 + $0x38] sm:$0xff]
      %v371 = vld [vmem:[%s364 + $0x48] sm:$0xff]
      %v372 = vld [vmem:[%s364 + $0x50] sm:$0xff]
      %v373 = vld [vmem:[%s364 + $0x60] sm:$0xff]
      %v374 = vld [vmem:[%s364 + $0x68] sm:$0xff]
      %v375 = vld [vmem:[%s364 + $0x78] sm:$0xff]
      %v376 = vld [vmem:[%s364 + $0x80] sm:$0xff]
      %v377 = vld [vmem:[%s364 + $0x90] sm:$0xff]
      %v378 = vld [vmem:[%s364 + $0x98] sm:$0xff]
      %v379 = vld [vmem:[%s364 + $0xa8] sm:$0xff]
      %v380 = vld [vmem:[%s364 + $0xb0] sm:$0xff]
      %v381 = vld [vmem:[%s364 + $0xc0] sm:$0xff]
      %v382 = vld [vmem:[%s364 + $0xc8] sm:$0xff]
      %v383 = vld [vmem:[%s364 + $0xd8] sm:$0xff]
      %v384 = vld [vmem:[%s364 + $0xe0] sm:$0xff]
      %v385 = vld [vmem:[%s364 + $0xf0] sm:$0xff]
      %v386 = vld [vmem:[%s364 + $0xf8] sm:$0xff]
      %v387 = vld [vmem:[%s364 + $0x108] sm:$0xff]
      %v388 = vld [vmem:[%s364 + $0x110] sm:$0xff]
      %v389 = vld [vmem:[%s364 + $0x120] sm:$0xff]
      %v390 = vld [vmem:[%s364 + $0x128] sm:$0xff]
      %v391 = vld [vmem:[%s364 + $0x138] sm:$0xff]
      %v392 = vld [vmem:[%s364 + $0x140] sm:$0xff]
      %v393 = vld [vmem:[%s364 + $0x150] sm:$0xff]
      %v394 = vld [vmem:[%s364 + $0x158] sm:$0xff]
      %v395 = vld [vmem:[%s364 + $0x168] sm:$0xff]
      %v396 = vld [vmem:[%s364 + $0x170] sm:$0xff]
      %v397 = vpack.c.bf16 %v365, %v365
      %v398 = vpack.c.bf16 %v366, %v366
      %v399 = vpack.c.bf16 %v367, %v367
      %v400 = vpack.c.bf16 %v368, %v368
      %v401 = vpack.c.bf16 %v369, %v369
      %v402 = vpack.c.bf16 %v370, %v370
      %v403 = vpack.c.bf16 %v371, %v371
      %v404 = vpack.c.bf16 %v372, %v372
      %v405 = vpack.c.bf16 %v373, %v373
      %v406 = vpack.c.bf16 %v374, %v374
      %v407 = vpack.c.bf16 %v375, %v375
      %v408 = vpack.c.bf16 %v376, %v376
      %v409 = vpack.c.bf16 %v377, %v377
      %v410 = vpack.c.bf16 %v378, %v378
      %v411 = vpack.c.bf16 %v379, %v379
      %v412 = vpack.c.bf16 %v380, %v380
      %v413 = vpack.c.bf16 %v381, %v381
      %v414 = vpack.c.bf16 %v382, %v382
      %v415 = vpack.c.bf16 %v383, %v383
      %v416 = vpack.c.bf16 %v384, %v384
      %v417 = vpack.c.bf16 %v385, %v385
      %v418 = vpack.c.bf16 %v386, %v386
      %v419 = vpack.c.bf16 %v387, %v387
      %v420 = vpack.c.bf16 %v388, %v388
      %v421 = vpack.c.bf16 %v389, %v389
      %v422 = vpack.c.bf16 %v390, %v390
      %v423 = vpack.c.bf16 %v391, %v391
      %v424 = vpack.c.bf16 %v392, %v392
      %v425 = vpack.c.bf16 %v393, %v393
      %v426 = vpack.c.bf16 %v394, %v394
      %v427 = vpack.c.bf16 %v395, %v395
      %v428 = vpack.c.bf16 %v396, %v396
      %v429 = vld [vmem:[%s364 + $0x1] sm:$0xff]
      %v430 = vld [vmem:[%s364 + $0x9] sm:$0xff]
      %v431 = vld [vmem:[%s364 + $0x19] sm:$0xff]
      %v432 = vld [vmem:[%s364 + $0x21] sm:$0xff]
      %v433 = vld [vmem:[%s364 + $0x31] sm:$0xff]
      %v434 = vld [vmem:[%s364 + $0x39] sm:$0xff]
      %v435 = vld [vmem:[%s364 + $0x49] sm:$0xff]
      %v436 = vld [vmem:[%s364 + $0x51] sm:$0xff]
      %v437 = vld [vmem:[%s364 + $0x61] sm:$0xff]
      %v438 = vld [vmem:[%s364 + $0x69] sm:$0xff]
      %v439 = vld [vmem:[%s364 + $0x79] sm:$0xff]
      %v440 = vld [vmem:[%s364 + $0x81] sm:$0xff]
      %v441 = vld [vmem:[%s364 + $0x91] sm:$0xff]
      %v442 = vld [vmem:[%s364 + $0x99] sm:$0xff]
      %v443 = vld [vmem:[%s364 + $0xa9] sm:$0xff]
      %v444 = vld [vmem:[%s364 + $0xb1] sm:$0xff]
      %v445 = vld [vmem:[%s364 + $0xc1] sm:$0xff]
      %v446 = vld [vmem:[%s364 + $0xc9] sm:$0xff]
      %v447 = vld [vmem:[%s364 + $0xd9] sm:$0xff]
      %v448 = vld [vmem:[%s364 + $0xe1] sm:$0xff]
      %v449 = vld [vmem:[%s364 + $0xf1] sm:$0xff]
      %v450 = vld [vmem:[%s364 + $0xf9] sm:$0xff]
      %v451 = vld [vmem:[%s364 + $0x109] sm:$0xff]
      %v452 = vld [vmem:[%s364 + $0x111] sm:$0xff]
      %v453 = vld [vmem:[%s364 + $0x121] sm:$0xff]
      %v454 = vld [vmem:[%s364 + $0x129] sm:$0xff]
      %v455 = vld [vmem:[%s364 + $0x139] sm:$0xff]
      %v456 = vld [vmem:[%s364 + $0x141] sm:$0xff]
      %v457 = vld [vmem:[%s364 + $0x151] sm:$0xff]
      %v458 = vld [vmem:[%s364 + $0x159] sm:$0xff]
      %v459 = vld [vmem:[%s364 + $0x169] sm:$0xff]
      %v460 = vld [vmem:[%s364 + $0x171] sm:$0xff]
      %v461 = vpack.c.bf16 %v429, %v429
      %v462 = vpack.c.bf16 %v430, %v430
      %v463 = vpack.c.bf16 %v431, %v431
      %v464 = vpack.c.bf16 %v432, %v432
      %v465 = vpack.c.bf16 %v433, %v433
      %v466 = vpack.c.bf16 %v434, %v434
      %v467 = vpack.c.bf16 %v435, %v435
      %v468 = vpack.c.bf16 %v436, %v436
      %v469 = vpack.c.bf16 %v437, %v437
      %v470 = vpack.c.bf16 %v438, %v438
      %v471 = vpack.c.bf16 %v439, %v439
      %v472 = vpack.c.bf16 %v440, %v440
      %v473 = vpack.c.bf16 %v441, %v441
      %v474 = vpack.c.bf16 %v442, %v442
      %v475 = vpack.c.bf16 %v443, %v443
      %v476 = vpack.c.bf16 %v444, %v444
      %v477 = vpack.c.bf16 %v445, %v445
      %v478 = vpack.c.bf16 %v446, %v446
      %v479 = vpack.c.bf16 %v447, %v447
      %v480 = vpack.c.bf16 %v448, %v448
      %v481 = vpack.c.bf16 %v449, %v449
      %v482 = vpack.c.bf16 %v450, %v450
      %v483 = vpack.c.bf16 %v451, %v451
      %v484 = vpack.c.bf16 %v452, %v452
      %v485 = vpack.c.bf16 %v453, %v453
      %v486 = vpack.c.bf16 %v454, %v454
      %v487 = vpack.c.bf16 %v455, %v455
      %v488 = vpack.c.bf16 %v456, %v456
      %v489 = vpack.c.bf16 %v457, %v457
      %v490 = vpack.c.bf16 %v458, %v458
      %v491 = vpack.c.bf16 %v459, %v459
      %v492 = vpack.c.bf16 %v460, %v460
      %v493 = vld [vmem:[%s364 + $0x2] sm:$0xff]
      %v494 = vld [vmem:[%s364 + $0xa] sm:$0xff]
      %v495 = vld [vmem:[%s364 + $0x1a] sm:$0xff]
      %v496 = vld [vmem:[%s364 + $0x22] sm:$0xff]
      %v497 = vld [vmem:[%s364 + $0x32] sm:$0xff]
      %v498 = vld [vmem:[%s364 + $0x3a] sm:$0xff]
      %v499 = vld [vmem:[%s364 + $0x4a] sm:$0xff]
      %v500 = vld [vmem:[%s364 + $0x52] sm:$0xff]
      %v501 = vld [vmem:[%s364 + $0x62] sm:$0xff]
      %v502 = vld [vmem:[%s364 + $0x6a] sm:$0xff]
      %v503 = vld [vmem:[%s364 + $0x7a] sm:$0xff]
      %v504 = vld [vmem:[%s364 + $0x82] sm:$0xff]
      %v505 = vld [vmem:[%s364 + $0x92] sm:$0xff]
      %v506 = vld [vmem:[%s364 + $0x9a] sm:$0xff]
      %v507 = vld [vmem:[%s364 + $0xaa] sm:$0xff]
      %v508 = vld [vmem:[%s364 + $0xb2] sm:$0xff]
      %v509 = vld [vmem:[%s364 + $0xc2] sm:$0xff]
      %v510 = vld [vmem:[%s364 + $0xca] sm:$0xff]
      %v511 = vld [vmem:[%s364 + $0xda] sm:$0xff]
      %v512 = vld [vmem:[%s364 + $0xe2] sm:$0xff]
      %v513 = vld [vmem:[%s364 + $0xf2] sm:$0xff]
      %v514 = vld [vmem:[%s364 + $0xfa] sm:$0xff]
      %v515 = vld [vmem:[%s364 + $0x10a] sm:$0xff]
      %v516 = vld [vmem:[%s364 + $0x112] sm:$0xff]
      %v517 = vld [vmem:[%s364 + $0x122] sm:$0xff]
      %v518 = vld [vmem:[%s364 + $0x12a] sm:$0xff]
      %v519 = vld [vmem:[%s364 + $0x13a] sm:$0xff]
      %v520 = vld [vmem:[%s364 + $0x142] sm:$0xff]
      %v521 = vld [vmem:[%s364 + $0x152] sm:$0xff]
      %v522 = vld [vmem:[%s364 + $0x15a] sm:$0xff]
      %v523 = vld [vmem:[%s364 + $0x16a] sm:$0xff]
      %v524 = vld [vmem:[%s364 + $0x172] sm:$0xff]
      %v525 = vpack.c.bf16 %v493, %v493
      %v526 = vpack.c.bf16 %v494, %v494
      %v527 = vpack.c.bf16 %v495, %v495
      %v528 = vpack.c.bf16 %v496, %v496
      %v529 = vpack.c.bf16 %v497, %v497
      %v530 = vpack.c.bf16 %v498, %v498
      %v531 = vpack.c.bf16 %v499, %v499
      %v532 = vpack.c.bf16 %v500, %v500
      %v533 = vpack.c.bf16 %v501, %v501
      %v534 = vpack.c.bf16 %v502, %v502
      %v535 = vpack.c.bf16 %v503, %v503
      %v536 = vpack.c.bf16 %v504, %v504
      %v537 = vpack.c.bf16 %v505, %v505
      %v538 = vpack.c.bf16 %v506, %v506
      %v539 = vpack.c.bf16 %v507, %v507
      %v540 = vpack.c.bf16 %v508, %v508
      %v541 = vpack.c.bf16 %v509, %v509
      %v542 = vpack.c.bf16 %v510, %v510
      %v543 = vpack.c.bf16 %v511, %v511
      %v544 = vpack.c.bf16 %v512, %v512
      %v545 = vpack.c.bf16 %v513, %v513
      %v546 = vpack.c.bf16 %v514, %v514
      %v547 = vpack.c.bf16 %v515, %v515
      %v548 = vpack.c.bf16 %v516, %v516
      %v549 = vpack.c.bf16 %v517, %v517
      %v550 = vpack.c.bf16 %v518, %v518
      %v551 = vpack.c.bf16 %v519, %v519
      %v552 = vpack.c.bf16 %v520, %v520
      %v553 = vpack.c.bf16 %v521, %v521
      %v554 = vpack.c.bf16 %v522, %v522
      %v555 = vpack.c.bf16 %v523, %v523
      %v556 = vpack.c.bf16 %v524, %v524
      %s557 = scalar_lea.vmem %s165, 48
      %v558 = vld [vmem:[%s557] sm:$0xff]
      %v559 = vld [vmem:[%s557 + $0x8] sm:$0xff]
      %v560 = vld [vmem:[%s557 + $0x18] sm:$0xff]
      %v561 = vld [vmem:[%s557 + $0x20] sm:$0xff]
      %v562 = vld [vmem:[%s557 + $0x30] sm:$0xff]
      %v563 = vld [vmem:[%s557 + $0x38] sm:$0xff]
      %v564 = vld [vmem:[%s557 + $0x48] sm:$0xff]
      %v565 = vld [vmem:[%s557 + $0x50] sm:$0xff]
      %v566 = vld [vmem:[%s557 + $0x60] sm:$0xff]
      %v567 = vld [vmem:[%s557 + $0x68] sm:$0xff]
      %v568 = vld [vmem:[%s557 + $0x78] sm:$0xff]
      %v569 = vld [vmem:[%s557 + $0x80] sm:$0xff]
      %v570 = vld [vmem:[%s557 + $0x90] sm:$0xff]
      %v571 = vld [vmem:[%s557 + $0x98] sm:$0xff]
      %v572 = vld [vmem:[%s557 + $0xa8] sm:$0xff]
      %v573 = vld [vmem:[%s557 + $0xb0] sm:$0xff]
      %v574 = vld [vmem:[%s557 + $0xc0] sm:$0xff]
      %v575 = vld [vmem:[%s557 + $0xc8] sm:$0xff]
      %v576 = vld [vmem:[%s557 + $0xd8] sm:$0xff]
      %v577 = vld [vmem:[%s557 + $0xe0] sm:$0xff]
      %v578 = vld [vmem:[%s557 + $0xf0] sm:$0xff]
      %v579 = vld [vmem:[%s557 + $0xf8] sm:$0xff]
      %v580 = vld [vmem:[%s557 + $0x108] sm:$0xff]
      %v581 = vld [vmem:[%s557 + $0x110] sm:$0xff]
      %v582 = vld [vmem:[%s557 + $0x120] sm:$0xff]
      %v583 = vld [vmem:[%s557 + $0x128] sm:$0xff]
      %v584 = vld [vmem:[%s557 + $0x138] sm:$0xff]
      %v585 = vld [vmem:[%s557 + $0x140] sm:$0xff]
      %v586 = vld [vmem:[%s557 + $0x150] sm:$0xff]
      %v587 = vld [vmem:[%s557 + $0x158] sm:$0xff]
      %v588 = vld [vmem:[%s557 + $0x168] sm:$0xff]
      %v589 = vld [vmem:[%s557 + $0x170] sm:$0xff]
      %v590 = vpack.c.bf16 %v558, %v558
      %v591 = vpack.c.bf16 %v559, %v559
      %v592 = vpack.c.bf16 %v560, %v560
      %v593 = vpack.c.bf16 %v561, %v561
      %v594 = vpack.c.bf16 %v562, %v562
      %v595 = vpack.c.bf16 %v563, %v563
      %v596 = vpack.c.bf16 %v564, %v564
      %v597 = vpack.c.bf16 %v565, %v565
      %v598 = vpack.c.bf16 %v566, %v566
      %v599 = vpack.c.bf16 %v567, %v567
      %v600 = vpack.c.bf16 %v568, %v568
      %v601 = vpack.c.bf16 %v569, %v569
      %v602 = vpack.c.bf16 %v570, %v570
      %v603 = vpack.c.bf16 %v571, %v571
      %v604 = vpack.c.bf16 %v572, %v572
      %v605 = vpack.c.bf16 %v573, %v573
      %v606 = vpack.c.bf16 %v574, %v574
      %v607 = vpack.c.bf16 %v575, %v575
      %v608 = vpack.c.bf16 %v576, %v576
      %v609 = vpack.c.bf16 %v577, %v577
      %v610 = vpack.c.bf16 %v578, %v578
      %v611 = vpack.c.bf16 %v579, %v579
      %v612 = vpack.c.bf16 %v580, %v580
      %v613 = vpack.c.bf16 %v581, %v581
      %v614 = vpack.c.bf16 %v582, %v582
      %v615 = vpack.c.bf16 %v583, %v583
      %v616 = vpack.c.bf16 %v584, %v584
      %v617 = vpack.c.bf16 %v585, %v585
      %v618 = vpack.c.bf16 %v586, %v586
      %v619 = vpack.c.bf16 %v587, %v587
      %v620 = vpack.c.bf16 %v588, %v588
      %v621 = vpack.c.bf16 %v589, %v589
      %v622 = vld [vmem:[%s557 + $0x1] sm:$0xff]
      %v623 = vld [vmem:[%s557 + $0x9] sm:$0xff]
      %v624 = vld [vmem:[%s557 + $0x19] sm:$0xff]
      %v625 = vld [vmem:[%s557 + $0x21] sm:$0xff]
      %v626 = vld [vmem:[%s557 + $0x31] sm:$0xff]
      %v627 = vld [vmem:[%s557 + $0x39] sm:$0xff]
      %v628 = vld [vmem:[%s557 + $0x49] sm:$0xff]
      %v629 = vld [vmem:[%s557 + $0x51] sm:$0xff]
      %v630 = vld [vmem:[%s557 + $0x61] sm:$0xff]
      %v631 = vld [vmem:[%s557 + $0x69] sm:$0xff]
      %v632 = vld [vmem:[%s557 + $0x79] sm:$0xff]
      %v633 = vld [vmem:[%s557 + $0x81] sm:$0xff]
      %v634 = vld [vmem:[%s557 + $0x91] sm:$0xff]
      %v635 = vld [vmem:[%s557 + $0x99] sm:$0xff]
      %v636 = vld [vmem:[%s557 + $0xa9] sm:$0xff]
      %v637 = vld [vmem:[%s557 + $0xb1] sm:$0xff]
      %v638 = vld [vmem:[%s557 + $0xc1] sm:$0xff]
      %v639 = vld [vmem:[%s557 + $0xc9] sm:$0xff]
      %v640 = vld [vmem:[%s557 + $0xd9] sm:$0xff]
      %v641 = vld [vmem:[%s557 + $0xe1] sm:$0xff]
      %v642 = vld [vmem:[%s557 + $0xf1] sm:$0xff]
      %v643 = vld [vmem:[%s557 + $0xf9] sm:$0xff]
      %v644 = vld [vmem:[%s557 + $0x109] sm:$0xff]
      %v645 = vld [vmem:[%s557 + $0x111] sm:$0xff]
      %v646 = vld [vmem:[%s557 + $0x121] sm:$0xff]
      %v647 = vld [vmem:[%s557 + $0x129] sm:$0xff]
      %v648 = vld [vmem:[%s557 + $0x139] sm:$0xff]
      %v649 = vld [vmem:[%s557 + $0x141] sm:$0xff]
      %v650 = vld [vmem:[%s557 + $0x151] sm:$0xff]
      %v651 = vld [vmem:[%s557 + $0x159] sm:$0xff]
      %v652 = vld [vmem:[%s557 + $0x169] sm:$0xff]
      %v653 = vld [vmem:[%s557 + $0x171] sm:$0xff]
      %v654 = vpack.c.bf16 %v622, %v622
      %v655 = vpack.c.bf16 %v623, %v623
      %v656 = vpack.c.bf16 %v624, %v624
      %v657 = vpack.c.bf16 %v625, %v625
      %v658 = vpack.c.bf16 %v626, %v626
      %v659 = vpack.c.bf16 %v627, %v627
      %v660 = vpack.c.bf16 %v628, %v628
      %v661 = vpack.c.bf16 %v629, %v629
      %v662 = vpack.c.bf16 %v630, %v630
      %v663 = vpack.c.bf16 %v631, %v631
      %v664 = vpack.c.bf16 %v632, %v632
      %v665 = vpack.c.bf16 %v633, %v633
      %v666 = vpack.c.bf16 %v634, %v634
      %v667 = vpack.c.bf16 %v635, %v635
      %v668 = vpack.c.bf16 %v636, %v636
      %v669 = vpack.c.bf16 %v637, %v637
      %v670 = vpack.c.bf16 %v638, %v638
      %v671 = vpack.c.bf16 %v639, %v639
      %v672 = vpack.c.bf16 %v640, %v640
      %v673 = vpack.c.bf16 %v641, %v641
      %v674 = vpack.c.bf16 %v642, %v642
      %v675 = vpack.c.bf16 %v643, %v643
      %v676 = vpack.c.bf16 %v644, %v644
      %v677 = vpack.c.bf16 %v645, %v645
      %v678 = vpack.c.bf16 %v646, %v646
      %v679 = vpack.c.bf16 %v647, %v647
      %v680 = vpack.c.bf16 %v648, %v648
      %v681 = vpack.c.bf16 %v649, %v649
      %v682 = vpack.c.bf16 %v650, %v650
      %v683 = vpack.c.bf16 %v651, %v651
      %v684 = vpack.c.bf16 %v652, %v652
      %v685 = vpack.c.bf16 %v653, %v653
      %v686 = vld [vmem:[%s557 + $0x2] sm:$0xff]
      %v687 = vld [vmem:[%s557 + $0xa] sm:$0xff]
      %v688 = vld [vmem:[%s557 + $0x1a] sm:$0xff]
      %v689 = vld [vmem:[%s557 + $0x22] sm:$0xff]
      %v690 = vld [vmem:[%s557 + $0x32] sm:$0xff]
      %v691 = vld [vmem:[%s557 + $0x3a] sm:$0xff]
      %v692 = vld [vmem:[%s557 + $0x4a] sm:$0xff]
      %v693 = vld [vmem:[%s557 + $0x52] sm:$0xff]
      %v694 = vld [vmem:[%s557 + $0x62] sm:$0xff]
      %v695 = vld [vmem:[%s557 + $0x6a] sm:$0xff]
      %v696 = vld [vmem:[%s557 + $0x7a] sm:$0xff]
      %v697 = vld [vmem:[%s557 + $0x82] sm:$0xff]
      %v698 = vld [vmem:[%s557 + $0x92] sm:$0xff]
      %v699 = vld [vmem:[%s557 + $0x9a] sm:$0xff]
      %v700 = vld [vmem:[%s557 + $0xaa] sm:$0xff]
      %v701 = vld [vmem:[%s557 + $0xb2] sm:$0xff]
      %v702 = vld [vmem:[%s557 + $0xc2] sm:$0xff]
      %v703 = vld [vmem:[%s557 + $0xca] sm:$0xff]
      %v704 = vld [vmem:[%s557 + $0xda] sm:$0xff]
      %v705 = vld [vmem:[%s557 + $0xe2] sm:$0xff]
      %v706 = vld [vmem:[%s557 + $0xf2] sm:$0xff]
      %v707 = vld [vmem:[%s557 + $0xfa] sm:$0xff]
      %v708 = vld [vmem:[%s557 + $0x10a] sm:$0xff]
      %v709 = vld [vmem:[%s557 + $0x112] sm:$0xff]
      %v710 = vld [vmem:[%s557 + $0x122] sm:$0xff]
      %v711 = vld [vmem:[%s557 + $0x12a] sm:$0xff]
      %v712 = vld [vmem:[%s557 + $0x13a] sm:$0xff]
      %v713 = vld [vmem:[%s557 + $0x142] sm:$0xff]
      %v714 = vld [vmem:[%s557 + $0x152] sm:$0xff]
      %v715 = vld [vmem:[%s557 + $0x15a] sm:$0xff]
      %v716 = vld [vmem:[%s557 + $0x16a] sm:$0xff]
      %v717 = vld [vmem:[%s557 + $0x172] sm:$0xff]
      %v718 = vpack.c.bf16 %v686, %v686
      %v719 = vpack.c.bf16 %v687, %v687
      %v720 = vpack.c.bf16 %v688, %v688
      %v721 = vpack.c.bf16 %v689, %v689
      %v722 = vpack.c.bf16 %v690, %v690
      %v723 = vpack.c.bf16 %v691, %v691
      %v724 = vpack.c.bf16 %v692, %v692
      %v725 = vpack.c.bf16 %v693, %v693
      %v726 = vpack.c.bf16 %v694, %v694
      %v727 = vpack.c.bf16 %v695, %v695
      %v728 = vpack.c.bf16 %v696, %v696
      %v729 = vpack.c.bf16 %v697, %v697
      %v730 = vpack.c.bf16 %v698, %v698
      %v731 = vpack.c.bf16 %v699, %v699
      %v732 = vpack.c.bf16 %v700, %v700
      %v733 = vpack.c.bf16 %v701, %v701
      %v734 = vpack.c.bf16 %v702, %v702
      %v735 = vpack.c.bf16 %v703, %v703
      %v736 = vpack.c.bf16 %v704, %v704
      %v737 = vpack.c.bf16 %v705, %v705
      %v738 = vpack.c.bf16 %v706, %v706
      %v739 = vpack.c.bf16 %v707, %v707
      %v740 = vpack.c.bf16 %v708, %v708
      %v741 = vpack.c.bf16 %v709, %v709
      %v742 = vpack.c.bf16 %v710, %v710
      %v743 = vpack.c.bf16 %v711, %v711
      %v744 = vpack.c.bf16 %v712, %v712
      %v745 = vpack.c.bf16 %v713, %v713
      %v746 = vpack.c.bf16 %v714, %v714
      %v747 = vpack.c.bf16 %v715, %v715
      %v748 = vpack.c.bf16 %v716, %v716
      %v749 = vpack.c.bf16 %v717, %v717
      %v782 = vunpack.c.l.b16 %v204
      %v783 = vunpack.c.l.b16 %v205
      %v784 = vunpack.c.l.b16 %v206
      %v785 = vunpack.c.l.b16 %v207
      %v786 = vunpack.c.l.b16 %v208
      %v787 = vunpack.c.l.b16 %v209
      %v788 = vunpack.c.l.b16 %v210
      %v789 = vunpack.c.l.b16 %v211
      %v790 = vunpack.c.l.b16 %v212
      %v791 = vunpack.c.l.b16 %v213
      %v792 = vunpack.c.l.b16 %v214
      %v793 = vunpack.c.l.b16 %v215
      %v794 = vunpack.c.l.b16 %v216
      %v795 = vunpack.c.l.b16 %v217
      %v796 = vunpack.c.l.b16 %v218
      %v797 = vunpack.c.l.b16 %v219
      %v798 = vunpack.c.l.b16 %v220
      %v799 = vunpack.c.l.b16 %v221
      %v800 = vunpack.c.l.b16 %v222
      %v801 = vunpack.c.l.b16 %v223
      %v802 = vunpack.c.l.b16 %v224
      %v803 = vunpack.c.l.b16 %v225
      %v804 = vunpack.c.l.b16 %v226
      %v805 = vunpack.c.l.b16 %v227
      %v806 = vunpack.c.l.b16 %v228
      %v807 = vunpack.c.l.b16 %v229
      %v808 = vunpack.c.l.b16 %v230
      %v809 = vunpack.c.l.b16 %v231
      %v810 = vunpack.c.l.b16 %v232
      %v811 = vunpack.c.l.b16 %v233
      %v812 = vunpack.c.l.b16 %v234
      %v813 = vunpack.c.l.b16 %v235
      %v814 = vpack.c.b16 %v783, %v782
      %v815 = vpack.c.b16 %v785, %v784
      %v816 = vpack.c.b16 %v787, %v786
      %v817 = vpack.c.b16 %v789, %v788
      %v818 = vpack.c.b16 %v791, %v790
      %v819 = vpack.c.b16 %v793, %v792
      %v820 = vpack.c.b16 %v795, %v794
      %v821 = vpack.c.b16 %v797, %v796
      %v822 = vpack.c.b16 %v799, %v798
      %v823 = vpack.c.b16 %v801, %v800
      %v824 = vpack.c.b16 %v803, %v802
      %v825 = vpack.c.b16 %v805, %v804
      %v826 = vpack.c.b16 %v807, %v806
      %v827 = vpack.c.b16 %v809, %v808
      %v828 = vpack.c.b16 %v811, %v810
      %v829 = vpack.c.b16 %v813, %v812
      %v862 = vunpack.c.l.b16 %v268
      %v863 = vunpack.c.l.b16 %v269
      %v864 = vunpack.c.l.b16 %v270
      %v865 = vunpack.c.l.b16 %v271
      %v866 = vunpack.c.l.b16 %v272
      %v867 = vunpack.c.l.b16 %v273
      %v868 = vunpack.c.l.b16 %v274
      %v869 = vunpack.c.l.b16 %v275
      %v870 = vunpack.c.l.b16 %v276
      %v871 = vunpack.c.l.b16 %v277
      %v872 = vunpack.c.l.b16 %v278
      %v873 = vunpack.c.l.b16 %v279
      %v874 = vunpack.c.l.b16 %v280
      %v875 = vunpack.c.l.b16 %v281
      %v876 = vunpack.c.l.b16 %v282
      %v877 = vunpack.c.l.b16 %v283
      %v878 = vunpack.c.l.b16 %v284
      %v879 = vunpack.c.l.b16 %v285
      %v880 = vunpack.c.l.b16 %v286
      %v881 = vunpack.c.l.b16 %v287
      %v882 = vunpack.c.l.b16 %v288
      %v883 = vunpack.c.l.b16 %v289
      %v884 = vunpack.c.l.b16 %v290
      %v885 = vunpack.c.l.b16 %v291
      %v886 = vunpack.c.l.b16 %v292
      %v887 = vunpack.c.l.b16 %v293
      %v888 = vunpack.c.l.b16 %v294
      %v889 = vunpack.c.l.b16 %v295
      %v890 = vunpack.c.l.b16 %v296
      %v891 = vunpack.c.l.b16 %v297
      %v892 = vunpack.c.l.b16 %v298
      %v893 = vunpack.c.l.b16 %v299
      %v894 = vpack.c.b16 %v863, %v862
      %v895 = vpack.c.b16 %v865, %v864
      %v896 = vpack.c.b16 %v867, %v866
      %v897 = vpack.c.b16 %v869, %v868
      %v898 = vpack.c.b16 %v871, %v870
      %v899 = vpack.c.b16 %v873, %v872
      %v900 = vpack.c.b16 %v875, %v874
      %v901 = vpack.c.b16 %v877, %v876
      %v902 = vpack.c.b16 %v879, %v878
      %v903 = vpack.c.b16 %v881, %v880
      %v904 = vpack.c.b16 %v883, %v882
      %v905 = vpack.c.b16 %v885, %v884
      %v906 = vpack.c.b16 %v887, %v886
      %v907 = vpack.c.b16 %v889, %v888
      %v908 = vpack.c.b16 %v891, %v890
      %v909 = vpack.c.b16 %v893, %v892
      %910 = vrot.lane.b32.xlu0 %v894, 4
      %v911 = vpop.permute.xlu0 %910
      %912 = vrot.lane.b32.xlu0 %v895, 4
      %v913 = vpop.permute.xlu0 %912
      %914 = vrot.lane.b32.xlu0 %v896, 4
      %v915 = vpop.permute.xlu0 %914
      %916 = vrot.lane.b32.xlu0 %v897, 4
      %v917 = vpop.permute.xlu0 %916
      %918 = vrot.lane.b32.xlu0 %v898, 4
      %v919 = vpop.permute.xlu0 %918
      %920 = vrot.lane.b32.xlu0 %v899, 4
      %v921 = vpop.permute.xlu0 %920
      %922 = vrot.lane.b32.xlu0 %v900, 4
      %v923 = vpop.permute.xlu0 %922
      %924 = vrot.lane.b32.xlu0 %v901, 4
      %v925 = vpop.permute.xlu0 %924
      %926 = vrot.lane.b32.xlu0 %v902, 4
      %v927 = vpop.permute.xlu0 %926
      %928 = vrot.lane.b32.xlu0 %v903, 4
      %v929 = vpop.permute.xlu0 %928
      %930 = vrot.lane.b32.xlu0 %v904, 4
      %v931 = vpop.permute.xlu0 %930
      %932 = vrot.lane.b32.xlu0 %v905, 4
      %v933 = vpop.permute.xlu0 %932
      %934 = vrot.lane.b32.xlu0 %v906, 4
      %v935 = vpop.permute.xlu0 %934
      %936 = vrot.lane.b32.xlu0 %v907, 4
      %v937 = vpop.permute.xlu0 %936
      %938 = vrot.lane.b32.xlu0 %v908, 4
      %v939 = vpop.permute.xlu0 %938
      %940 = vrot.lane.b32.xlu0 %v909, 4
      %v941 = vpop.permute.xlu0 %940
      %v974 = vunpack.c.l.b16 %v332
      %v975 = vunpack.c.l.b16 %v333
      %v976 = vunpack.c.l.b16 %v334
      %v977 = vunpack.c.l.b16 %v335
      %v978 = vunpack.c.l.b16 %v336
      %v979 = vunpack.c.l.b16 %v337
      %v980 = vunpack.c.l.b16 %v338
      %v981 = vunpack.c.l.b16 %v339
      %v982 = vunpack.c.l.b16 %v340
      %v983 = vunpack.c.l.b16 %v341
      %v984 = vunpack.c.l.b16 %v342
      %v985 = vunpack.c.l.b16 %v343
      %v986 = vunpack.c.l.b16 %v344
      %v987 = vunpack.c.l.b16 %v345
      %v988 = vunpack.c.l.b16 %v346
      %v989 = vunpack.c.l.b16 %v347
      %v990 = vunpack.c.l.b16 %v348
      %v991 = vunpack.c.l.b16 %v349
      %v992 = vunpack.c.l.b16 %v350
      %v993 = vunpack.c.l.b16 %v351
      %v994 = vunpack.c.l.b16 %v352
      %v995 = vunpack.c.l.b16 %v353
      %v996 = vunpack.c.l.b16 %v354
      %v997 = vunpack.c.l.b16 %v355
      %v998 = vunpack.c.l.b16 %v356
      %v999 = vunpack.c.l.b16 %v357
      %v1000 = vunpack.c.l.b16 %v358
      %v1001 = vunpack.c.l.b16 %v359
      %v1002 = vunpack.c.l.b16 %v360
      %v1003 = vunpack.c.l.b16 %v361
      %v1004 = vunpack.c.l.b16 %v362
      %v1005 = vunpack.c.l.b16 %v363
      %v1006 = vpack.c.b16 %v975, %v974
      %v1007 = vpack.c.b16 %v977, %v976
      %v1008 = vpack.c.b16 %v979, %v978
      %v1009 = vpack.c.b16 %v981, %v980
      %v1010 = vpack.c.b16 %v983, %v982
      %v1011 = vpack.c.b16 %v985, %v984
      %v1012 = vpack.c.b16 %v987, %v986
      %v1013 = vpack.c.b16 %v989, %v988
      %v1014 = vpack.c.b16 %v991, %v990
      %v1015 = vpack.c.b16 %v993, %v992
      %v1016 = vpack.c.b16 %v995, %v994
      %v1017 = vpack.c.b16 %v997, %v996
      %v1018 = vpack.c.b16 %v999, %v998
      %v1019 = vpack.c.b16 %v1001, %v1000
      %v1020 = vpack.c.b16 %v1003, %v1002
      %v1021 = vpack.c.b16 %v1005, %v1004
      %1022 = vrot.lane.b32.xlu0 %v1006, 8
      %v1023 = vpop.permute.xlu0 %1022
      %1024 = vrot.lane.b32.xlu0 %v1007, 8
      %v1025 = vpop.permute.xlu0 %1024
      %1026 = vrot.lane.b32.xlu0 %v1008, 8
      %v1027 = vpop.permute.xlu0 %1026
      %1028 = vrot.lane.b32.xlu0 %v1009, 8
      %v1029 = vpop.permute.xlu0 %1028
      %1030 = vrot.lane.b32.xlu0 %v1010, 8
      %v1031 = vpop.permute.xlu0 %1030
      %1032 = vrot.lane.b32.xlu0 %v1011, 8
      %v1033 = vpop.permute.xlu0 %1032
      %1034 = vrot.lane.b32.xlu0 %v1012, 8
      %v1035 = vpop.permute.xlu0 %1034
      %1036 = vrot.lane.b32.xlu0 %v1013, 8
      %v1037 = vpop.permute.xlu0 %1036
      %1038 = vrot.lane.b32.xlu0 %v1014, 8
      %v1039 = vpop.permute.xlu0 %1038
      %1040 = vrot.lane.b32.xlu0 %v1015, 8
      %v1041 = vpop.permute.xlu0 %1040
      %1042 = vrot.lane.b32.xlu0 %v1016, 8
      %v1043 = vpop.permute.xlu0 %1042
      %1044 = vrot.lane.b32.xlu0 %v1017, 8
      %v1045 = vpop.permute.xlu0 %1044
      %1046 = vrot.lane.b32.xlu0 %v1018, 8
      %v1047 = vpop.permute.xlu0 %1046
      %1048 = vrot.lane.b32.xlu0 %v1019, 8
      %v1049 = vpop.permute.xlu0 %1048
      %1050 = vrot.lane.b32.xlu0 %v1020, 8
      %v1051 = vpop.permute.xlu0 %1050
      %1052 = vrot.lane.b32.xlu0 %v1021, 8
      %v1053 = vpop.permute.xlu0 %1052
      %v1086 = vunpack.c.l.b16 %v397
      %v1087 = vunpack.c.l.b16 %v398
      %v1088 = vunpack.c.l.b16 %v399
      %v1089 = vunpack.c.l.b16 %v400
      %v1090 = vunpack.c.l.b16 %v401
      %v1091 = vunpack.c.l.b16 %v402
      %v1092 = vunpack.c.l.b16 %v403
      %v1093 = vunpack.c.l.b16 %v404
      %v1094 = vunpack.c.l.b16 %v405
      %v1095 = vunpack.c.l.b16 %v406
      %v1096 = vunpack.c.l.b16 %v407
      %v1097 = vunpack.c.l.b16 %v408
      %v1098 = vunpack.c.l.b16 %v409
      %v1099 = vunpack.c.l.b16 %v410
      %v1100 = vunpack.c.l.b16 %v411
      %v1101 = vunpack.c.l.b16 %v412
      %v1102 = vunpack.c.l.b16 %v413
      %v1103 = vunpack.c.l.b16 %v414
      %v1104 = vunpack.c.l.b16 %v415
      %v1105 = vunpack.c.l.b16 %v416
      %v1106 = vunpack.c.l.b16 %v417
      %v1107 = vunpack.c.l.b16 %v418
      %v1108 = vunpack.c.l.b16 %v419
      %v1109 = vunpack.c.l.b16 %v420
      %v1110 = vunpack.c.l.b16 %v421
      %v1111 = vunpack.c.l.b16 %v422
      %v1112 = vunpack.c.l.b16 %v423
      %v1113 = vunpack.c.l.b16 %v424
      %v1114 = vunpack.c.l.b16 %v425
      %v1115 = vunpack.c.l.b16 %v426
      %v1116 = vunpack.c.l.b16 %v427
      %v1117 = vunpack.c.l.b16 %v428
      %v1118 = vpack.c.b16 %v1087, %v1086
      %v1119 = vpack.c.b16 %v1089, %v1088
      %v1120 = vpack.c.b16 %v1091, %v1090
      %v1121 = vpack.c.b16 %v1093, %v1092
      %v1122 = vpack.c.b16 %v1095, %v1094
      %v1123 = vpack.c.b16 %v1097, %v1096
      %v1124 = vpack.c.b16 %v1099, %v1098
      %v1125 = vpack.c.b16 %v1101, %v1100
      %v1126 = vpack.c.b16 %v1103, %v1102
      %v1127 = vpack.c.b16 %v1105, %v1104
      %v1128 = vpack.c.b16 %v1107, %v1106
      %v1129 = vpack.c.b16 %v1109, %v1108
      %v1130 = vpack.c.b16 %v1111, %v1110
      %v1131 = vpack.c.b16 %v1113, %v1112
      %v1132 = vpack.c.b16 %v1115, %v1114
      %v1133 = vpack.c.b16 %v1117, %v1116
      %1134 = vrot.lane.b32.xlu0 %v1118, 12
      %v1135 = vpop.permute.xlu0 %1134
      %1136 = vrot.lane.b32.xlu0 %v1119, 12
      %v1137 = vpop.permute.xlu0 %1136
      %1138 = vrot.lane.b32.xlu0 %v1120, 12
      %v1139 = vpop.permute.xlu0 %1138
      %1140 = vrot.lane.b32.xlu0 %v1121, 12
      %v1141 = vpop.permute.xlu0 %1140
      %1142 = vrot.lane.b32.xlu0 %v1122, 12
      %v1143 = vpop.permute.xlu0 %1142
      %1144 = vrot.lane.b32.xlu0 %v1123, 12
      %v1145 = vpop.permute.xlu0 %1144
      %1146 = vrot.lane.b32.xlu0 %v1124, 12
      %v1147 = vpop.permute.xlu0 %1146
      %1148 = vrot.lane.b32.xlu0 %v1125, 12
      %v1149 = vpop.permute.xlu0 %1148
      %1150 = vrot.lane.b32.xlu0 %v1126, 12
      %v1151 = vpop.permute.xlu0 %1150
      %1152 = vrot.lane.b32.xlu0 %v1127, 12
      %v1153 = vpop.permute.xlu0 %1152
      %1154 = vrot.lane.b32.xlu0 %v1128, 12
      %v1155 = vpop.permute.xlu0 %1154
      %1156 = vrot.lane.b32.xlu0 %v1129, 12
      %v1157 = vpop.permute.xlu0 %1156
      %1158 = vrot.lane.b32.xlu0 %v1130, 12
      %v1159 = vpop.permute.xlu0 %1158
      %1160 = vrot.lane.b32.xlu0 %v1131, 12
      %v1161 = vpop.permute.xlu0 %1160
      %1162 = vrot.lane.b32.xlu0 %v1132, 12
      %v1163 = vpop.permute.xlu0 %1162
      %1164 = vrot.lane.b32.xlu0 %v1133, 12
      %v1165 = vpop.permute.xlu0 %1164
      %v1198 = vunpack.c.l.b16 %v461
      %v1199 = vunpack.c.l.b16 %v462
      %v1200 = vunpack.c.l.b16 %v463
      %v1201 = vunpack.c.l.b16 %v464
      %v1202 = vunpack.c.l.b16 %v465
      %v1203 = vunpack.c.l.b16 %v466
      %v1204 = vunpack.c.l.b16 %v467
      %v1205 = vunpack.c.l.b16 %v468
      %v1206 = vunpack.c.l.b16 %v469
      %v1207 = vunpack.c.l.b16 %v470
      %v1208 = vunpack.c.l.b16 %v471
      %v1209 = vunpack.c.l.b16 %v472
      %v1210 = vunpack.c.l.b16 %v473
      %v1211 = vunpack.c.l.b16 %v474
      %v1212 = vunpack.c.l.b16 %v475
      %v1213 = vunpack.c.l.b16 %v476
      %v1214 = vunpack.c.l.b16 %v477
      %v1215 = vunpack.c.l.b16 %v478
      %v1216 = vunpack.c.l.b16 %v479
      %v1217 = vunpack.c.l.b16 %v480
      %v1218 = vunpack.c.l.b16 %v481
      %v1219 = vunpack.c.l.b16 %v482
      %v1220 = vunpack.c.l.b16 %v483
      %v1221 = vunpack.c.l.b16 %v484
      %v1222 = vunpack.c.l.b16 %v485
      %v1223 = vunpack.c.l.b16 %v486
      %v1224 = vunpack.c.l.b16 %v487
      %v1225 = vunpack.c.l.b16 %v488
      %v1226 = vunpack.c.l.b16 %v489
      %v1227 = vunpack.c.l.b16 %v490
      %v1228 = vunpack.c.l.b16 %v491
      %v1229 = vunpack.c.l.b16 %v492
      %v1230 = vpack.c.b16 %v1199, %v1198
      %v1231 = vpack.c.b16 %v1201, %v1200
      %v1232 = vpack.c.b16 %v1203, %v1202
      %v1233 = vpack.c.b16 %v1205, %v1204
      %v1234 = vpack.c.b16 %v1207, %v1206
      %v1235 = vpack.c.b16 %v1209, %v1208
      %v1236 = vpack.c.b16 %v1211, %v1210
      %v1237 = vpack.c.b16 %v1213, %v1212
      %v1238 = vpack.c.b16 %v1215, %v1214
      %v1239 = vpack.c.b16 %v1217, %v1216
      %v1240 = vpack.c.b16 %v1219, %v1218
      %v1241 = vpack.c.b16 %v1221, %v1220
      %v1242 = vpack.c.b16 %v1223, %v1222
      %v1243 = vpack.c.b16 %v1225, %v1224
      %v1244 = vpack.c.b16 %v1227, %v1226
      %v1245 = vpack.c.b16 %v1229, %v1228
      %1246 = vrot.lane.b32.xlu0 %v1230, 16
      %v1247 = vpop.permute.xlu0 %1246
      %1248 = vrot.lane.b32.xlu0 %v1231, 16
      %v1249 = vpop.permute.xlu0 %1248
      %1250 = vrot.lane.b32.xlu0 %v1232, 16
      %v1251 = vpop.permute.xlu0 %1250
      %1252 = vrot.lane.b32.xlu0 %v1233, 16
      %v1253 = vpop.permute.xlu0 %1252
      %1254 = vrot.lane.b32.xlu0 %v1234, 16
      %v1255 = vpop.permute.xlu0 %1254
      %1256 = vrot.lane.b32.xlu0 %v1235, 16
      %v1257 = vpop.permute.xlu0 %1256
      %1258 = vrot.lane.b32.xlu0 %v1236, 16
      %v1259 = vpop.permute.xlu0 %1258
      %1260 = vrot.lane.b32.xlu0 %v1237, 16
      %v1261 = vpop.permute.xlu0 %1260
      %1262 = vrot.lane.b32.xlu0 %v1238, 16
      %v1263 = vpop.permute.xlu0 %1262
      %1264 = vrot.lane.b32.xlu0 %v1239, 16
      %v1265 = vpop.permute.xlu0 %1264
      %1266 = vrot.lane.b32.xlu0 %v1240, 16
      %v1267 = vpop.permute.xlu0 %1266
      %1268 = vrot.lane.b32.xlu0 %v1241, 16
      %v1269 = vpop.permute.xlu0 %1268
      %1270 = vrot.lane.b32.xlu0 %v1242, 16
      %v1271 = vpop.permute.xlu0 %1270
      %1272 = vrot.lane.b32.xlu0 %v1243, 16
      %v1273 = vpop.permute.xlu0 %1272
      %1274 = vrot.lane.b32.xlu0 %v1244, 16
      %v1275 = vpop.permute.xlu0 %1274
      %1276 = vrot.lane.b32.xlu0 %v1245, 16
      %v1277 = vpop.permute.xlu0 %1276
      %v1310 = vunpack.c.l.b16 %v525
      %v1311 = vunpack.c.l.b16 %v526
      %v1312 = vunpack.c.l.b16 %v527
      %v1313 = vunpack.c.l.b16 %v528
      %v1314 = vunpack.c.l.b16 %v529
      %v1315 = vunpack.c.l.b16 %v530
      %v1316 = vunpack.c.l.b16 %v531
      %v1317 = vunpack.c.l.b16 %v532
      %v1318 = vunpack.c.l.b16 %v533
      %v1319 = vunpack.c.l.b16 %v534
      %v1320 = vunpack.c.l.b16 %v535
      %v1321 = vunpack.c.l.b16 %v536
      %v1322 = vunpack.c.l.b16 %v537
      %v1323 = vunpack.c.l.b16 %v538
      %v1324 = vunpack.c.l.b16 %v539
      %v1325 = vunpack.c.l.b16 %v540
      %v1326 = vunpack.c.l.b16 %v541
      %v1327 = vunpack.c.l.b16 %v542
      %v1328 = vunpack.c.l.b16 %v543
      %v1329 = vunpack.c.l.b16 %v544
      %v1330 = vunpack.c.l.b16 %v545
      %v1331 = vunpack.c.l.b16 %v546
      %v1332 = vunpack.c.l.b16 %v547
      %v1333 = vunpack.c.l.b16 %v548
      %v1334 = vunpack.c.l.b16 %v549
      %v1335 = vunpack.c.l.b16 %v550
      %v1336 = vunpack.c.l.b16 %v551
      %v1337 = vunpack.c.l.b16 %v552
      %v1338 = vunpack.c.l.b16 %v553
      %v1339 = vunpack.c.l.b16 %v554
      %v1340 = vunpack.c.l.b16 %v555
      %v1341 = vunpack.c.l.b16 %v556
      %v1342 = vpack.c.b16 %v1311, %v1310
      %v1343 = vpack.c.b16 %v1313, %v1312
      %v1344 = vpack.c.b16 %v1315, %v1314
      %v1345 = vpack.c.b16 %v1317, %v1316
      %v1346 = vpack.c.b16 %v1319, %v1318
      %v1347 = vpack.c.b16 %v1321, %v1320
      %v1348 = vpack.c.b16 %v1323, %v1322
      %v1349 = vpack.c.b16 %v1325, %v1324
      %v1350 = vpack.c.b16 %v1327, %v1326
      %v1351 = vpack.c.b16 %v1329, %v1328
      %v1352 = vpack.c.b16 %v1331, %v1330
      %v1353 = vpack.c.b16 %v1333, %v1332
      %v1354 = vpack.c.b16 %v1335, %v1334
      %v1355 = vpack.c.b16 %v1337, %v1336
      %v1356 = vpack.c.b16 %v1339, %v1338
      %v1357 = vpack.c.b16 %v1341, %v1340
      %1358 = vrot.lane.b32.xlu0 %v1342, 20
      %v1359 = vpop.permute.xlu0 %1358
      %1360 = vrot.lane.b32.xlu0 %v1343, 20
      %v1361 = vpop.permute.xlu0 %1360
      %1362 = vrot.lane.b32.xlu0 %v1344, 20
      %v1363 = vpop.permute.xlu0 %1362
      %1364 = vrot.lane.b32.xlu0 %v1345, 20
      %v1365 = vpop.permute.xlu0 %1364
      %1366 = vrot.lane.b32.xlu0 %v1346, 20
      %v1367 = vpop.permute.xlu0 %1366
      %1368 = vrot.lane.b32.xlu0 %v1347, 20
      %v1369 = vpop.permute.xlu0 %1368
      %1370 = vrot.lane.b32.xlu0 %v1348, 20
      %v1371 = vpop.permute.xlu0 %1370
      %1372 = vrot.lane.b32.xlu0 %v1349, 20
      %v1373 = vpop.permute.xlu0 %1372
      %1374 = vrot.lane.b32.xlu0 %v1350, 20
      %v1375 = vpop.permute.xlu0 %1374
      %1376 = vrot.lane.b32.xlu0 %v1351, 20
      %v1377 = vpop.permute.xlu0 %1376
      %1378 = vrot.lane.b32.xlu0 %v1352, 20
      %v1379 = vpop.permute.xlu0 %1378
      %1380 = vrot.lane.b32.xlu0 %v1353, 20
      %v1381 = vpop.permute.xlu0 %1380
      %1382 = vrot.lane.b32.xlu0 %v1354, 20
      %v1383 = vpop.permute.xlu0 %1382
      %1384 = vrot.lane.b32.xlu0 %v1355, 20
      %v1385 = vpop.permute.xlu0 %1384
      %1386 = vrot.lane.b32.xlu0 %v1356, 20
      %v1387 = vpop.permute.xlu0 %1386
      %1388 = vrot.lane.b32.xlu0 %v1357, 20
      %v1389 = vpop.permute.xlu0 %1388
      %v1422 = vunpack.c.l.b16 %v590
      %v1423 = vunpack.c.l.b16 %v591
      %v1424 = vunpack.c.l.b16 %v592
      %v1425 = vunpack.c.l.b16 %v593
      %v1426 = vunpack.c.l.b16 %v594
      %v1427 = vunpack.c.l.b16 %v595
      %v1428 = vunpack.c.l.b16 %v596
      %v1429 = vunpack.c.l.b16 %v597
      %v1430 = vunpack.c.l.b16 %v598
      %v1431 = vunpack.c.l.b16 %v599
      %v1432 = vunpack.c.l.b16 %v600
      %v1433 = vunpack.c.l.b16 %v601
      %v1434 = vunpack.c.l.b16 %v602
      %v1435 = vunpack.c.l.b16 %v603
      %v1436 = vunpack.c.l.b16 %v604
      %v1437 = vunpack.c.l.b16 %v605
      %v1438 = vunpack.c.l.b16 %v606
      %v1439 = vunpack.c.l.b16 %v607
      %v1440 = vunpack.c.l.b16 %v608
      %v1441 = vunpack.c.l.b16 %v609
      %v1442 = vunpack.c.l.b16 %v610
      %v1443 = vunpack.c.l.b16 %v611
      %v1444 = vunpack.c.l.b16 %v612
      %v1445 = vunpack.c.l.b16 %v613
      %v1446 = vunpack.c.l.b16 %v614
      %v1447 = vunpack.c.l.b16 %v615
      %v1448 = vunpack.c.l.b16 %v616
      %v1449 = vunpack.c.l.b16 %v617
      %v1450 = vunpack.c.l.b16 %v618
      %v1451 = vunpack.c.l.b16 %v619
      %v1452 = vunpack.c.l.b16 %v620
      %v1453 = vunpack.c.l.b16 %v621
      %v1454 = vpack.c.b16 %v1423, %v1422
      %v1455 = vpack.c.b16 %v1425, %v1424
      %v1456 = vpack.c.b16 %v1427, %v1426
      %v1457 = vpack.c.b16 %v1429, %v1428
      %v1458 = vpack.c.b16 %v1431, %v1430
      %v1459 = vpack.c.b16 %v1433, %v1432
      %v1460 = vpack.c.b16 %v1435, %v1434
      %v1461 = vpack.c.b16 %v1437, %v1436
      %v1462 = vpack.c.b16 %v1439, %v1438
      %v1463 = vpack.c.b16 %v1441, %v1440
      %v1464 = vpack.c.b16 %v1443, %v1442
      %v1465 = vpack.c.b16 %v1445, %v1444
      %v1466 = vpack.c.b16 %v1447, %v1446
      %v1467 = vpack.c.b16 %v1449, %v1448
      %v1468 = vpack.c.b16 %v1451, %v1450
      %v1469 = vpack.c.b16 %v1453, %v1452
      %1470 = vrot.lane.b32.xlu0 %v1454, 24
      %v1471 = vpop.permute.xlu0 %1470
      %1472 = vrot.lane.b32.xlu0 %v1455, 24
      %v1473 = vpop.permute.xlu0 %1472
      %1474 = vrot.lane.b32.xlu0 %v1456, 24
      %v1475 = vpop.permute.xlu0 %1474
      %1476 = vrot.lane.b32.xlu0 %v1457, 24
      %v1477 = vpop.permute.xlu0 %1476
      %1478 = vrot.lane.b32.xlu0 %v1458, 24
      %v1479 = vpop.permute.xlu0 %1478
      %1480 = vrot.lane.b32.xlu0 %v1459, 24
      %v1481 = vpop.permute.xlu0 %1480
      %1482 = vrot.lane.b32.xlu0 %v1460, 24
      %v1483 = vpop.permute.xlu0 %1482
      %1484 = vrot.lane.b32.xlu0 %v1461, 24
      %v1485 = vpop.permute.xlu0 %1484
      %1486 = vrot.lane.b32.xlu0 %v1462, 24
      %v1487 = vpop.permute.xlu0 %1486
      %1488 = vrot.lane.b32.xlu0 %v1463, 24
      %v1489 = vpop.permute.xlu0 %1488
      %1490 = vrot.lane.b32.xlu0 %v1464, 24
      %v1491 = vpop.permute.xlu0 %1490
      %1492 = vrot.lane.b32.xlu0 %v1465, 24
      %v1493 = vpop.permute.xlu0 %1492
      %1494 = vrot.lane.b32.xlu0 %v1466, 24
      %v1495 = vpop.permute.xlu0 %1494
      %1496 = vrot.lane.b32.xlu0 %v1467, 24
      %v1497 = vpop.permute.xlu0 %1496
      %1498 = vrot.lane.b32.xlu0 %v1468, 24
      %v1499 = vpop.permute.xlu0 %1498
      %1500 = vrot.lane.b32.xlu0 %v1469, 24
      %v1501 = vpop.permute.xlu0 %1500
      %v1534 = vunpack.c.l.b16 %v654
      %v1535 = vunpack.c.l.b16 %v655
      %v1536 = vunpack.c.l.b16 %v656
      %v1537 = vunpack.c.l.b16 %v657
      %v1538 = vunpack.c.l.b16 %v658
      %v1539 = vunpack.c.l.b16 %v659
      %v1540 = vunpack.c.l.b16 %v660
      %v1541 = vunpack.c.l.b16 %v661
      %v1542 = vunpack.c.l.b16 %v662
      %v1543 = vunpack.c.l.b16 %v663
      %v1544 = vunpack.c.l.b16 %v664
      %v1545 = vunpack.c.l.b16 %v665
      %v1546 = vunpack.c.l.b16 %v666
      %v1547 = vunpack.c.l.b16 %v667
      %v1548 = vunpack.c.l.b16 %v668
      %v1549 = vunpack.c.l.b16 %v669
      %v1550 = vunpack.c.l.b16 %v670
      %v1551 = vunpack.c.l.b16 %v671
      %v1552 = vunpack.c.l.b16 %v672
      %v1553 = vunpack.c.l.b16 %v673
      %v1554 = vunpack.c.l.b16 %v674
      %v1555 = vunpack.c.l.b16 %v675
      %v1556 = vunpack.c.l.b16 %v676
      %v1557 = vunpack.c.l.b16 %v677
      %v1558 = vunpack.c.l.b16 %v678
      %v1559 = vunpack.c.l.b16 %v679
      %v1560 = vunpack.c.l.b16 %v680
      %v1561 = vunpack.c.l.b16 %v681
      %v1562 = vunpack.c.l.b16 %v682
      %v1563 = vunpack.c.l.b16 %v683
      %v1564 = vunpack.c.l.b16 %v684
      %v1565 = vunpack.c.l.b16 %v685
      %v1566 = vpack.c.b16 %v1535, %v1534
      %v1567 = vpack.c.b16 %v1537, %v1536
      %v1568 = vpack.c.b16 %v1539, %v1538
      %v1569 = vpack.c.b16 %v1541, %v1540
      %v1570 = vpack.c.b16 %v1543, %v1542
      %v1571 = vpack.c.b16 %v1545, %v1544
      %v1572 = vpack.c.b16 %v1547, %v1546
      %v1573 = vpack.c.b16 %v1549, %v1548
      %v1574 = vpack.c.b16 %v1551, %v1550
      %v1575 = vpack.c.b16 %v1553, %v1552
      %v1576 = vpack.c.b16 %v1555, %v1554
      %v1577 = vpack.c.b16 %v1557, %v1556
      %v1578 = vpack.c.b16 %v1559, %v1558
      %v1579 = vpack.c.b16 %v1561, %v1560
      %v1580 = vpack.c.b16 %v1563, %v1562
      %v1581 = vpack.c.b16 %v1565, %v1564
      %1582 = vrot.lane.b32.xlu0 %v1566, 28
      %v1583 = vpop.permute.xlu0 %1582
      %1584 = vrot.lane.b32.xlu0 %v1567, 28
      %v1585 = vpop.permute.xlu0 %1584
      %1586 = vrot.lane.b32.xlu0 %v1568, 28
      %v1587 = vpop.permute.xlu0 %1586
      %1588 = vrot.lane.b32.xlu0 %v1569, 28
      %v1589 = vpop.permute.xlu0 %1588
      %1590 = vrot.lane.b32.xlu0 %v1570, 28
      %v1591 = vpop.permute.xlu0 %1590
      %1592 = vrot.lane.b32.xlu0 %v1571, 28
      %v1593 = vpop.permute.xlu0 %1592
      %1594 = vrot.lane.b32.xlu0 %v1572, 28
      %v1595 = vpop.permute.xlu0 %1594
      %1596 = vrot.lane.b32.xlu0 %v1573, 28
      %v1597 = vpop.permute.xlu0 %1596
      %1598 = vrot.lane.b32.xlu0 %v1574, 28
      %v1599 = vpop.permute.xlu0 %1598
      %1600 = vrot.lane.b32.xlu0 %v1575, 28
      %v1601 = vpop.permute.xlu0 %1600
      %1602 = vrot.lane.b32.xlu0 %v1576, 28
      %v1603 = vpop.permute.xlu0 %1602
      %1604 = vrot.lane.b32.xlu0 %v1577, 28
      %v1605 = vpop.permute.xlu0 %1604
      %1606 = vrot.lane.b32.xlu0 %v1578, 28
      %v1607 = vpop.permute.xlu0 %1606
      %1608 = vrot.lane.b32.xlu0 %v1579, 28
      %v1609 = vpop.permute.xlu0 %1608
      %1610 = vrot.lane.b32.xlu0 %v1580, 28
      %v1611 = vpop.permute.xlu0 %1610
      %1612 = vrot.lane.b32.xlu0 %v1581, 28
      %v1613 = vpop.permute.xlu0 %1612
      %v1646 = vunpack.c.l.b16 %v718
      %v1647 = vunpack.c.l.b16 %v719
      %v1648 = vunpack.c.l.b16 %v720
      %v1649 = vunpack.c.l.b16 %v721
      %v1650 = vunpack.c.l.b16 %v722
      %v1651 = vunpack.c.l.b16 %v723
      %v1652 = vunpack.c.l.b16 %v724
      %v1653 = vunpack.c.l.b16 %v725
      %v1654 = vunpack.c.l.b16 %v726
      %v1655 = vunpack.c.l.b16 %v727
      %v1656 = vunpack.c.l.b16 %v728
      %v1657 = vunpack.c.l.b16 %v729
      %v1658 = vunpack.c.l.b16 %v730
      %v1659 = vunpack.c.l.b16 %v731
      %v1660 = vunpack.c.l.b16 %v732
      %v1661 = vunpack.c.l.b16 %v733
      %v1662 = vunpack.c.l.b16 %v734
      %v1663 = vunpack.c.l.b16 %v735
      %v1664 = vunpack.c.l.b16 %v736
      %v1665 = vunpack.c.l.b16 %v737
      %v1666 = vunpack.c.l.b16 %v738
      %v1667 = vunpack.c.l.b16 %v739
      %v1668 = vunpack.c.l.b16 %v740
      %v1669 = vunpack.c.l.b16 %v741
      %v1670 = vunpack.c.l.b16 %v742
      %v1671 = vunpack.c.l.b16 %v743
      %v1672 = vunpack.c.l.b16 %v744
      %v1673 = vunpack.c.l.b16 %v745
      %v1674 = vunpack.c.l.b16 %v746
      %v1675 = vunpack.c.l.b16 %v747
      %v1676 = vunpack.c.l.b16 %v748
      %v1677 = vunpack.c.l.b16 %v749
      %v1678 = vpack.c.b16 %v1647, %v1646
      %v1679 = vpack.c.b16 %v1649, %v1648
      %v1680 = vpack.c.b16 %v1651, %v1650
      %v1681 = vpack.c.b16 %v1653, %v1652
      %v1682 = vpack.c.b16 %v1655, %v1654
      %v1683 = vpack.c.b16 %v1657, %v1656
      %v1684 = vpack.c.b16 %v1659, %v1658
      %v1685 = vpack.c.b16 %v1661, %v1660
      %v1686 = vpack.c.b16 %v1663, %v1662
      %v1687 = vpack.c.b16 %v1665, %v1664
      %v1688 = vpack.c.b16 %v1667, %v1666
      %v1689 = vpack.c.b16 %v1669, %v1668
      %v1690 = vpack.c.b16 %v1671, %v1670
      %v1691 = vpack.c.b16 %v1673, %v1672
      %v1692 = vpack.c.b16 %v1675, %v1674
      %v1693 = vpack.c.b16 %v1677, %v1676
      %1694 = vrot.lane.b32.xlu0 %v1678, 32
      %v1695 = vpop.permute.xlu0 %1694
      %1696 = vrot.lane.b32.xlu0 %v1679, 32
      %v1697 = vpop.permute.xlu0 %1696
      %1698 = vrot.lane.b32.xlu0 %v1680, 32
      %v1699 = vpop.permute.xlu0 %1698
      %1700 = vrot.lane.b32.xlu0 %v1681, 32
      %v1701 = vpop.permute.xlu0 %1700
      %1702 = vrot.lane.b32.xlu0 %v1682, 32
      %v1703 = vpop.permute.xlu0 %1702
      %1704 = vrot.lane.b32.xlu0 %v1683, 32
      %v1705 = vpop.permute.xlu0 %1704
      %1706 = vrot.lane.b32.xlu0 %v1684, 32
      %v1707 = vpop.permute.xlu0 %1706
      %1708 = vrot.lane.b32.xlu0 %v1685, 32
      %v1709 = vpop.permute.xlu0 %1708
      %1710 = vrot.lane.b32.xlu0 %v1686, 32
      %v1711 = vpop.permute.xlu0 %1710
      %1712 = vrot.lane.b32.xlu0 %v1687, 32
      %v1713 = vpop.permute.xlu0 %1712
      %1714 = vrot.lane.b32.xlu0 %v1688, 32
      %v1715 = vpop.permute.xlu0 %1714
      %1716 = vrot.lane.b32.xlu0 %v1689, 32
      %v1717 = vpop.permute.xlu0 %1716
      %1718 = vrot.lane.b32.xlu0 %v1690, 32
      %v1719 = vpop.permute.xlu0 %1718
      %1720 = vrot.lane.b32.xlu0 %v1691, 32
      %v1721 = vpop.permute.xlu0 %1720
      %1722 = vrot.lane.b32.xlu0 %v1692, 32
      %v1723 = vpop.permute.xlu0 %1722
      %1724 = vrot.lane.b32.xlu0 %v1693, 32
      %v1725 = vpop.permute.xlu0 %1724
      %vm1726 = vcmask 31744
      %v1729 = vsel %vm1726, %v814, %v911
      %v1732 = vsel %vm1726, %v815, %v913
      %v1735 = vsel %vm1726, %v816, %v915
      %v1738 = vsel %vm1726, %v817, %v917
      %v1741 = vsel %vm1726, %v818, %v919
      %v1744 = vsel %vm1726, %v819, %v921
      %v1747 = vsel %vm1726, %v820, %v923
      %v1750 = vsel %vm1726, %v821, %v925
      %v1753 = vsel %vm1726, %v822, %v927
      %v1756 = vsel %vm1726, %v823, %v929
      %v1759 = vsel %vm1726, %v824, %v931
      %v1762 = vsel %vm1726, %v825, %v933
      %v1765 = vsel %vm1726, %v826, %v935
      %v1768 = vsel %vm1726, %v827, %v937
      %v1771 = vsel %vm1726, %v828, %v939
      %v1774 = vsel %vm1726, %v829, %v941
      %vm1775 = vcmask 64512
      %v1777 = vsel %vm1775, %v1729, %v1023
      %v1779 = vsel %vm1775, %v1732, %v1025
      %v1781 = vsel %vm1775, %v1735, %v1027
      %v1783 = vsel %vm1775, %v1738, %v1029
      %v1785 = vsel %vm1775, %v1741, %v1031
      %v1787 = vsel %vm1775, %v1744, %v1033
      %v1789 = vsel %vm1775, %v1747, %v1035
      %v1791 = vsel %vm1775, %v1750, %v1037
      %v1793 = vsel %vm1775, %v1753, %v1039
      %v1795 = vsel %vm1775, %v1756, %v1041
      %v1797 = vsel %vm1775, %v1759, %v1043
      %v1799 = vsel %vm1775, %v1762, %v1045
      %v1801 = vsel %vm1775, %v1765, %v1047
      %v1803 = vsel %vm1775, %v1768, %v1049
      %v1805 = vsel %vm1775, %v1771, %v1051
      %v1807 = vsel %vm1775, %v1774, %v1053
      %vm1808 = vcmask 97280
      %v1810 = vsel %vm1808, %v1777, %v1135
      %v1812 = vsel %vm1808, %v1779, %v1137
      %v1814 = vsel %vm1808, %v1781, %v1139
      %v1816 = vsel %vm1808, %v1783, %v1141
      %v1818 = vsel %vm1808, %v1785, %v1143
      %v1820 = vsel %vm1808, %v1787, %v1145
      %v1822 = vsel %vm1808, %v1789, %v1147
      %v1824 = vsel %vm1808, %v1791, %v1149
      %v1826 = vsel %vm1808, %v1793, %v1151
      %v1828 = vsel %vm1808, %v1795, %v1153
      %v1830 = vsel %vm1808, %v1797, %v1155
      %v1832 = vsel %vm1808, %v1799, %v1157
      %v1834 = vsel %vm1808, %v1801, %v1159
      %v1836 = vsel %vm1808, %v1803, %v1161
      %v1838 = vsel %vm1808, %v1805, %v1163
      %v1840 = vsel %vm1808, %v1807, %v1165
      %vm1841 = vcmask 130048
      %v1843 = vsel %vm1841, %v1810, %v1247
      %v1845 = vsel %vm1841, %v1812, %v1249
      %v1847 = vsel %vm1841, %v1814, %v1251
      %v1849 = vsel %vm1841, %v1816, %v1253
      %v1851 = vsel %vm1841, %v1818, %v1255
      %v1853 = vsel %vm1841, %v1820, %v1257
      %v1855 = vsel %vm1841, %v1822, %v1259
      %v1857 = vsel %vm1841, %v1824, %v1261
      %v1859 = vsel %vm1841, %v1826, %v1263
      %v1861 = vsel %vm1841, %v1828, %v1265
      %v1863 = vsel %vm1841, %v1830, %v1267
      %v1865 = vsel %vm1841, %v1832, %v1269
      %v1867 = vsel %vm1841, %v1834, %v1271
      %v1869 = vsel %vm1841, %v1836, %v1273
      %v1871 = vsel %vm1841, %v1838, %v1275
      %v1873 = vsel %vm1841, %v1840, %v1277
      %vm1874 = vcmask 162816
      %v1876 = vsel %vm1874, %v1843, %v1359
      %v1878 = vsel %vm1874, %v1845, %v1361
      %v1880 = vsel %vm1874, %v1847, %v1363
      %v1882 = vsel %vm1874, %v1849, %v1365
      %v1884 = vsel %vm1874, %v1851, %v1367
      %v1886 = vsel %vm1874, %v1853, %v1369
      %v1888 = vsel %vm1874, %v1855, %v1371
      %v1890 = vsel %vm1874, %v1857, %v1373
      %v1892 = vsel %vm1874, %v1859, %v1375
      %v1894 = vsel %vm1874, %v1861, %v1377
      %v1896 = vsel %vm1874, %v1863, %v1379
      %v1898 = vsel %vm1874, %v1865, %v1381
      %v1900 = vsel %vm1874, %v1867, %v1383
      %v1902 = vsel %vm1874, %v1869, %v1385
      %v1904 = vsel %vm1874, %v1871, %v1387
      %v1906 = vsel %vm1874, %v1873, %v1389
      %vm1907 = vcmask 195584
      %v1909 = vsel %vm1907, %v1876, %v1471
      %v1911 = vsel %vm1907, %v1878, %v1473
      %v1913 = vsel %vm1907, %v1880, %v1475
      %v1915 = vsel %vm1907, %v1882, %v1477
      %v1917 = vsel %vm1907, %v1884, %v1479
      %v1919 = vsel %vm1907, %v1886, %v1481
      %v1921 = vsel %vm1907, %v1888, %v1483
      %v1923 = vsel %vm1907, %v1890, %v1485
      %v1925 = vsel %vm1907, %v1892, %v1487
      %v1927 = vsel %vm1907, %v1894, %v1489
      %v1929 = vsel %vm1907, %v1896, %v1491
      %v1931 = vsel %vm1907, %v1898, %v1493
      %v1933 = vsel %vm1907, %v1900, %v1495
      %v1935 = vsel %vm1907, %v1902, %v1497
      %v1937 = vsel %vm1907, %v1904, %v1499
      %v1939 = vsel %vm1907, %v1906, %v1501
      %vm1940 = vcmask 228352
      %v1942 = vsel %vm1940, %v1909, %v1583
      %v1944 = vsel %vm1940, %v1911, %v1585
      %v1946 = vsel %vm1940, %v1913, %v1587
      %v1948 = vsel %vm1940, %v1915, %v1589
      %v1950 = vsel %vm1940, %v1917, %v1591
      %v1952 = vsel %vm1940, %v1919, %v1593
      %v1954 = vsel %vm1940, %v1921, %v1595
      %v1956 = vsel %vm1940, %v1923, %v1597
      %v1958 = vsel %vm1940, %v1925, %v1599
      %v1960 = vsel %vm1940, %v1927, %v1601
      %v1962 = vsel %vm1940, %v1929, %v1603
      %v1964 = vsel %vm1940, %v1931, %v1605
      %v1966 = vsel %vm1940, %v1933, %v1607
      %v1968 = vsel %vm1940, %v1935, %v1609
      %v1970 = vsel %vm1940, %v1937, %v1611
      %v1972 = vsel %vm1940, %v1939, %v1613
      %vm1973 = vcmask 261120
      %v1975 = vsel %vm1973, %v1942, %v1695
      %v1977 = vsel %vm1973, %v1944, %v1697
      %v1979 = vsel %vm1973, %v1946, %v1699
      %v1981 = vsel %vm1973, %v1948, %v1701
      %v1983 = vsel %vm1973, %v1950, %v1703
      %v1985 = vsel %vm1973, %v1952, %v1705
      %v1987 = vsel %vm1973, %v1954, %v1707
      %v1989 = vsel %vm1973, %v1956, %v1709
      %v1991 = vsel %vm1973, %v1958, %v1711
      %v1993 = vsel %vm1973, %v1960, %v1713
      %v1995 = vsel %vm1973, %v1962, %v1715
      %v1997 = vsel %vm1973, %v1964, %v1717
      %v1999 = vsel %vm1973, %v1966, %v1719
      %v2001 = vsel %vm1973, %v1968, %v1721
      %v2003 = vsel %vm1973, %v1970, %v1723
      %v2005 = vsel %vm1973, %v1972, %v1725
      %v2006 = vld [vmem:[%s1] sm:$0xf]
      %v2007 = vld [vmem:[%s1 + $0x4] sm:$0xf]
      %v2008 = vld [vmem:[%s1 + $0x8] sm:$0xf]
      %v2009 = vld [vmem:[%s1 + $0xc] sm:$0xf]
      %v2010 = vld [vmem:[%s1 + $0x10] sm:$0x3]
      %v2016 = vunpack.c.l.b16 %v2006
      %v2017 = vunpack.c.l.b16 %v2007
      %v2018 = vunpack.c.l.b16 %v2008
      %v2019 = vunpack.c.l.b16 %v2009
      %v2020 = vunpack.c.l.b16 %v2010
      %v2021 = vpack.c.b16 %v2017, %v2016
      %v2022 = vpack.c.b16 %v2019, %v2018
      %v2023 = vpack.c.b16 %v2020, %v2020
      %vm2026 = vcmask 293888
      %v2027 = vsel %vm2026, %v1975, 0
      %v2029 = vsel %vm2026, %v1977, 0
      %v2031 = vsel %vm2026, %v1979, 0
      %v2033 = vsel %vm2026, %v1981, 0
      %v2035 = vsel %vm2026, %v1983, 0
      %v2037 = vsel %vm2026, %v1985, 0
      %v2039 = vsel %vm2026, %v1987, 0
      %v2041 = vsel %vm2026, %v1989, 0
      %v2043 = vsel %vm2026, %v1991, 0
      %v2045 = vsel %vm2026, %v1993, 0
      %v2047 = vsel %vm2026, %v1995, 0
      %v2049 = vsel %vm2026, %v1997, 0
      %v2051 = vsel %vm2026, %v1999, 0
      %v2053 = vsel %vm2026, %v2001, 0
      %v2055 = vsel %vm2026, %v2003, 0
      %v2057 = vsel %vm2026, %v2005, 0
      %vm2059 = vcmask 1041408
      %v2061 = vsel %vm2059, %v2023, 0
      %2063 = vmatpush.bf16.msra.mxu0 0
      %2064 = vmatpush.bf16.msra.mxu0 0
      %2065 = vmatpush.bf16.msra.mxu0 0
      %2066 = vmatpush.bf16.msra.mxu0 0
      %2067 = vmatpush.bf16.msra.mxu0 0
      %2068 = vmatpush.bf16.msra.mxu0 %v2061
      %2069 = vmatpush.bf16.msra.mxu0 %v2022
      %2070 = vmatpush.bf16.msra.mxu0 %v2021
      %2071 = vmatmul.bf16.gmra.mxu0 %v2027
      %v2072 = vpop.f32.mrf.mxu0
      %v2073 = vadd.f32 0.0, %v2072
      %v2074 = vpop.f32.mrf.mxu0
      %v2075 = vadd.f32 0.0, %v2074
      %2076 = vmatmul.bf16.gmra.mxu0 %v2029
      %v2077 = vpop.f32.mrf.mxu0
      %v2078 = vadd.f32 0.0, %v2077
      %v2079 = vpop.f32.mrf.mxu0
      %v2080 = vadd.f32 0.0, %v2079
      %2081 = vmatmul.bf16.gmra.mxu0 %v2031
      %v2082 = vpop.f32.mrf.mxu0
      %v2083 = vadd.f32 0.0, %v2082
      %v2084 = vpop.f32.mrf.mxu0
      %v2085 = vadd.f32 0.0, %v2084
      %2086 = vmatmul.bf16.gmra.mxu0 %v2033
      %v2087 = vpop.f32.mrf.mxu0
      %v2088 = vadd.f32 0.0, %v2087
      %v2089 = vpop.f32.mrf.mxu0
      %v2090 = vadd.f32 0.0, %v2089
      %2091 = vmatmul.bf16.gmra.mxu0 %v2035
      %v2092 = vpop.f32.mrf.mxu0
      %v2093 = vadd.f32 0.0, %v2092
      %v2094 = vpop.f32.mrf.mxu0
      %v2095 = vadd.f32 0.0, %v2094
      %2096 = vmatmul.bf16.gmra.mxu0 %v2037
      %v2097 = vpop.f32.mrf.mxu0
      %v2098 = vadd.f32 0.0, %v2097
      %v2099 = vpop.f32.mrf.mxu0
      %v2100 = vadd.f32 0.0, %v2099
      %2101 = vmatmul.bf16.gmra.mxu0 %v2039
      %v2102 = vpop.f32.mrf.mxu0
      %v2103 = vadd.f32 0.0, %v2102
      %v2104 = vpop.f32.mrf.mxu0
      %v2105 = vadd.f32 0.0, %v2104
      %2106 = vmatmul.bf16.gmra.mxu0 %v2041
      %v2107 = vpop.f32.mrf.mxu0
      %v2108 = vadd.f32 0.0, %v2107
      %v2109 = vpop.f32.mrf.mxu0
      %v2110 = vadd.f32 0.0, %v2109
      %2111 = vmatmul.bf16.gmra.mxu0 %v2043
      %v2112 = vpop.f32.mrf.mxu0
      %v2113 = vadd.f32 0.0, %v2112
      %v2114 = vpop.f32.mrf.mxu0
      %v2115 = vadd.f32 0.0, %v2114
      %2116 = vmatmul.bf16.gmra.mxu0 %v2045
      %v2117 = vpop.f32.mrf.mxu0
      %v2118 = vadd.f32 0.0, %v2117
      %v2119 = vpop.f32.mrf.mxu0
      %v2120 = vadd.f32 0.0, %v2119
      %2121 = vmatmul.bf16.gmra.mxu0 %v2047
      %v2122 = vpop.f32.mrf.mxu0
      %v2123 = vadd.f32 0.0, %v2122
      %v2124 = vpop.f32.mrf.mxu0
      %v2125 = vadd.f32 0.0, %v2124
      %2126 = vmatmul.bf16.gmra.mxu0 %v2049
      %v2127 = vpop.f32.mrf.mxu0
      %v2128 = vadd.f32 0.0, %v2127
      %v2129 = vpop.f32.mrf.mxu0
      %v2130 = vadd.f32 0.0, %v2129
      %2131 = vmatmul.bf16.gmra.mxu0 %v2051
      %v2132 = vpop.f32.mrf.mxu0
      %v2133 = vadd.f32 0.0, %v2132
      %v2134 = vpop.f32.mrf.mxu0
      %v2135 = vadd.f32 0.0, %v2134
      %2136 = vmatmul.bf16.gmra.mxu0 %v2053
      %v2137 = vpop.f32.mrf.mxu0
      %v2138 = vadd.f32 0.0, %v2137
      %v2139 = vpop.f32.mrf.mxu0
      %v2140 = vadd.f32 0.0, %v2139
      %2141 = vmatmul.bf16.gmra.mxu0 %v2055
      %v2142 = vpop.f32.mrf.mxu0
      %v2143 = vadd.f32 0.0, %v2142
      %v2144 = vpop.f32.mrf.mxu0
      %v2145 = vadd.f32 0.0, %v2144
      %2146 = vmatmul.bf16.gmra.mxu0 %v2057
      %v2147 = vpop.f32.mrf.mxu0
      %v2148 = vadd.f32 0.0, %v2147
      %v2149 = vpop.f32.mrf.mxu0
      %v2150 = vadd.f32 0.0, %v2149
      %2151 = vdwg.mxu0
      %v2152 = vmax.f32 %v2073, 0.0
      %v2153 = vmax.f32 %v2075, 0.0
      %v2154 = vmax.f32 %v2078, 0.0
      %v2155 = vmax.f32 %v2080, 0.0
      %v2156 = vmax.f32 %v2083, 0.0
      %v2157 = vmax.f32 %v2085, 0.0
      %v2158 = vmax.f32 %v2088, 0.0
      %v2159 = vmax.f32 %v2090, 0.0
      %v2160 = vmax.f32 %v2093, 0.0
      %v2161 = vmax.f32 %v2095, 0.0
      %v2162 = vmax.f32 %v2098, 0.0
      %v2163 = vmax.f32 %v2100, 0.0
      %v2164 = vmax.f32 %v2103, 0.0
      %v2165 = vmax.f32 %v2105, 0.0
      %v2166 = vmax.f32 %v2108, 0.0
      %v2167 = vmax.f32 %v2110, 0.0
      %v2168 = vmax.f32 %v2113, 0.0
      %v2169 = vmax.f32 %v2115, 0.0
      %v2170 = vmax.f32 %v2118, 0.0
      %v2171 = vmax.f32 %v2120, 0.0
      %v2172 = vmax.f32 %v2123, 0.0
      %v2173 = vmax.f32 %v2125, 0.0
      %v2174 = vmax.f32 %v2128, 0.0
      %v2175 = vmax.f32 %v2130, 0.0
      %v2176 = vmax.f32 %v2133, 0.0
      %v2177 = vmax.f32 %v2135, 0.0
      %v2178 = vmax.f32 %v2138, 0.0
      %v2179 = vmax.f32 %v2140, 0.0
      %v2180 = vmax.f32 %v2143, 0.0
      %v2181 = vmax.f32 %v2145, 0.0
      %v2182 = vmax.f32 %v2148, 0.0
      %v2183 = vmax.f32 %v2150, 0.0
      %v2184 = vpack.c.bf16 %v2152, %v2152
      %v2185 = vpack.c.bf16 %v2153, %v2153
      %v2186 = vpack.c.bf16 %v2154, %v2154
      %v2187 = vpack.c.bf16 %v2155, %v2155
      %v2188 = vpack.c.bf16 %v2156, %v2156
      %v2189 = vpack.c.bf16 %v2157, %v2157
      %v2190 = vpack.c.bf16 %v2158, %v2158
      %v2191 = vpack.c.bf16 %v2159, %v2159
      %v2192 = vpack.c.bf16 %v2160, %v2160
      %v2193 = vpack.c.bf16 %v2161, %v2161
      %v2194 = vpack.c.bf16 %v2162, %v2162
      %v2195 = vpack.c.bf16 %v2163, %v2163
      %v2196 = vpack.c.bf16 %v2164, %v2164
      %v2197 = vpack.c.bf16 %v2165, %v2165
      %v2198 = vpack.c.bf16 %v2166, %v2166
      %v2199 = vpack.c.bf16 %v2167, %v2167
      %v2200 = vpack.c.bf16 %v2168, %v2168
      %v2201 = vpack.c.bf16 %v2169, %v2169
      %v2202 = vpack.c.bf16 %v2170, %v2170
      %v2203 = vpack.c.bf16 %v2171, %v2171
      %v2204 = vpack.c.bf16 %v2172, %v2172
      %v2205 = vpack.c.bf16 %v2173, %v2173
      %v2206 = vpack.c.bf16 %v2174, %v2174
      %v2207 = vpack.c.bf16 %v2175, %v2175
      %v2208 = vpack.c.bf16 %v2176, %v2176
      %v2209 = vpack.c.bf16 %v2177, %v2177
      %v2210 = vpack.c.bf16 %v2178, %v2178
      %v2211 = vpack.c.bf16 %v2179, %v2179
      %v2212 = vpack.c.bf16 %v2180, %v2180
      %v2213 = vpack.c.bf16 %v2181, %v2181
      %v2214 = vpack.c.bf16 %v2182, %v2182
      %v2215 = vpack.c.bf16 %v2183, %v2183
      %v2248 = vunpack.c.l.b16 %v2184
      %v2249 = vunpack.c.l.b16 %v2185
      %v2250 = vunpack.c.l.b16 %v2186
      %v2251 = vunpack.c.l.b16 %v2187
      %v2252 = vunpack.c.l.b16 %v2188
      %v2253 = vunpack.c.l.b16 %v2189
      %v2254 = vunpack.c.l.b16 %v2190
      %v2255 = vunpack.c.l.b16 %v2191
      %v2256 = vunpack.c.l.b16 %v2192
      %v2257 = vunpack.c.l.b16 %v2193
      %v2258 = vunpack.c.l.b16 %v2194
      %v2259 = vunpack.c.l.b16 %v2195
      %v2260 = vunpack.c.l.b16 %v2196
      %v2261 = vunpack.c.l.b16 %v2197
      %v2262 = vunpack.c.l.b16 %v2198
      %v2263 = vunpack.c.l.b16 %v2199
      %v2264 = vunpack.c.l.b16 %v2200
      %v2265 = vunpack.c.l.b16 %v2201
      %v2266 = vunpack.c.l.b16 %v2202
      %v2267 = vunpack.c.l.b16 %v2203
      %v2268 = vunpack.c.l.b16 %v2204
      %v2269 = vunpack.c.l.b16 %v2205
      %v2270 = vunpack.c.l.b16 %v2206
      %v2271 = vunpack.c.l.b16 %v2207
      %v2272 = vunpack.c.l.b16 %v2208
      %v2273 = vunpack.c.l.b16 %v2209
      %v2274 = vunpack.c.l.b16 %v2210
      %v2275 = vunpack.c.l.b16 %v2211
      %v2276 = vunpack.c.l.b16 %v2212
      %v2277 = vunpack.c.l.b16 %v2213
      %v2278 = vunpack.c.l.b16 %v2214
      %v2279 = vunpack.c.l.b16 %v2215
      %v2280 = vpack.c.b16 %v2249, %v2248
      %v2281 = vpack.c.b16 %v2251, %v2250
      %v2282 = vpack.c.b16 %v2253, %v2252
      %v2283 = vpack.c.b16 %v2255, %v2254
      %v2284 = vpack.c.b16 %v2257, %v2256
      %v2285 = vpack.c.b16 %v2259, %v2258
      %v2286 = vpack.c.b16 %v2261, %v2260
      %v2287 = vpack.c.b16 %v2263, %v2262
      %v2288 = vpack.c.b16 %v2265, %v2264
      %v2289 = vpack.c.b16 %v2267, %v2266
      %v2290 = vpack.c.b16 %v2269, %v2268
      %v2291 = vpack.c.b16 %v2271, %v2270
      %v2292 = vpack.c.b16 %v2273, %v2272
      %v2293 = vpack.c.b16 %v2275, %v2274
      %v2294 = vpack.c.b16 %v2277, %v2276
      %v2295 = vpack.c.b16 %v2279, %v2278
      %v2297 = vshrl.u32 0, 16
      %v2299 = vrot.slane %v2297, 7
      %v2300 = vshll.u32 0, 16
      %v2302 = vor.u32 %v2299, %v2300
      %v2304 = vshrl.u32 %v2280, 16
      %v2306 = vrot.slane %v2304, 7
      %v2307 = vshll.u32 %v2280, 16
      %v2309 = vor.u32 %v2306, %v2307
      %v2311 = vshrl.u32 %v2281, 16
      %v2313 = vrot.slane %v2311, 7
      %v2314 = vshll.u32 %v2281, 16
      %v2316 = vor.u32 %v2313, %v2314
      %v2318 = vshrl.u32 %v2282, 16
      %v2320 = vrot.slane %v2318, 7
      %v2321 = vshll.u32 %v2282, 16
      %v2323 = vor.u32 %v2320, %v2321
      %v2325 = vshrl.u32 %v2283, 16
      %v2327 = vrot.slane %v2325, 7
      %v2328 = vshll.u32 %v2283, 16
      %v2330 = vor.u32 %v2327, %v2328
      %v2332 = vshrl.u32 %v2284, 16
      %v2334 = vrot.slane %v2332, 7
      %v2335 = vshll.u32 %v2284, 16
      %v2337 = vor.u32 %v2334, %v2335
      %v2339 = vshrl.u32 %v2285, 16
      %v2341 = vrot.slane %v2339, 7
      %v2342 = vshll.u32 %v2285, 16
      %v2344 = vor.u32 %v2341, %v2342
      %v2346 = vshrl.u32 %v2286, 16
      %v2348 = vrot.slane %v2346, 7
      %v2349 = vshll.u32 %v2286, 16
      %v2351 = vor.u32 %v2348, %v2349
      %v2353 = vshrl.u32 %v2287, 16
      %v2355 = vrot.slane %v2353, 7
      %v2356 = vshll.u32 %v2287, 16
      %v2358 = vor.u32 %v2355, %v2356
      %v2360 = vshrl.u32 %v2288, 16
      %v2362 = vrot.slane %v2360, 7
      %v2363 = vshll.u32 %v2288, 16
      %v2365 = vor.u32 %v2362, %v2363
      %v2367 = vshrl.u32 %v2289, 16
      %v2369 = vrot.slane %v2367, 7
      %v2370 = vshll.u32 %v2289, 16
      %v2372 = vor.u32 %v2369, %v2370
      %v2374 = vshrl.u32 %v2290, 16
      %v2376 = vrot.slane %v2374, 7
      %v2377 = vshll.u32 %v2290, 16
      %v2379 = vor.u32 %v2376, %v2377
      %v2381 = vshrl.u32 %v2291, 16
      %v2383 = vrot.slane %v2381, 7
      %v2384 = vshll.u32 %v2291, 16
      %v2386 = vor.u32 %v2383, %v2384
      %v2388 = vshrl.u32 %v2292, 16
      %v2390 = vrot.slane %v2388, 7
      %v2391 = vshll.u32 %v2292, 16
      %v2393 = vor.u32 %v2390, %v2391
      %v2395 = vshrl.u32 %v2293, 16
      %v2397 = vrot.slane %v2395, 7
      %v2398 = vshll.u32 %v2293, 16
      %v2400 = vor.u32 %v2397, %v2398
      %v2402 = vshrl.u32 %v2294, 16
      %v2404 = vrot.slane %v2402, 7
      %v2405 = vshll.u32 %v2294, 16
      %v2407 = vor.u32 %v2404, %v2405
      %v2409 = vshrl.u32 %v2295, 16
      %v2411 = vrot.slane %v2409, 7
      %v2412 = vshll.u32 %v2295, 16
      %v2414 = vor.u32 %v2411, %v2412
      %vm2449 = vcmask 1040384
      %vm2450 = vsmask.f32 256
      %vm2451 = vmand %vm2449, %vm2450
      %v2452 = vsel %vm2451, 0, %v2302
      %v2453 = vsel %vm2451, 0, %v2309
      %v2454 = vsel %vm2451, 0, %v2316
      %v2455 = vsel %vm2451, 0, %v2323
      %v2456 = vsel %vm2451, 0, %v2330
      %v2457 = vsel %vm2451, 0, %v2337
      %v2458 = vsel %vm2451, 0, %v2344
      %v2459 = vsel %vm2451, 0, %v2351
      %v2460 = vsel %vm2451, 0, %v2358
      %v2461 = vsel %vm2451, 0, %v2365
      %v2462 = vsel %vm2451, 0, %v2372
      %v2463 = vsel %vm2451, 0, %v2379
      %v2464 = vsel %vm2451, 0, %v2386
      %v2465 = vsel %vm2451, 0, %v2393
      %v2466 = vsel %vm2451, 0, %v2400
      %v2467 = vsel %vm2451, 0, %v2407
      %v2468 = vsel %vm2451, 0, %v2414
      %v2469 = vsel %vm2451, %v2299, 0
      %v2470 = vsel %vm2451, %v2306, 0
      %v2471 = vsel %vm2451, %v2313, 0
      %v2472 = vsel %vm2451, %v2320, 0
      %v2473 = vsel %vm2451, %v2327, 0
      %v2474 = vsel %vm2451, %v2334, 0
      %v2475 = vsel %vm2451, %v2341, 0
      %v2476 = vsel %vm2451, %v2348, 0
      %v2477 = vsel %vm2451, %v2355, 0
      %v2478 = vsel %vm2451, %v2362, 0
      %v2479 = vsel %vm2451, %v2369, 0
      %v2480 = vsel %vm2451, %v2376, 0
      %v2481 = vsel %vm2451, %v2383, 0
      %v2482 = vsel %vm2451, %v2390, 0
      %v2483 = vsel %vm2451, %v2397, 0
      %v2484 = vsel %vm2451, %v2404, 0
      %v2485 = vsel %vm2451, %v2411, 0
      %vm2486 = vsmask.f32 7424
      %v2488 = vshrl.u32 %v2452, 16
      %v2490 = vshll.u32 %v2452, 16
      %v2492 = vrot.slane %v2490, 1
      %v2493 = vor.u32 %v2488, %v2492
      %v2495 = vshll.u32 %v2469, 16
      %v2497 = vrot.slane %v2495, 1
      %v2498 = vsel %vm2486, %v2493, %v2497
      %v2500 = vshrl.u32 %v2453, 16
      %v2502 = vshll.u32 %v2453, 16
      %v2504 = vrot.slane %v2502, 1
      %v2505 = vor.u32 %v2500, %v2504
      %v2507 = vshll.u32 %v2470, 16
      %v2509 = vrot.slane %v2507, 1
      %v2510 = vsel %vm2486, %v2505, %v2509
      %v2512 = vshrl.u32 %v2454, 16
      %v2514 = vshll.u32 %v2454, 16
      %v2516 = vrot.slane %v2514, 1
      %v2517 = vor.u32 %v2512, %v2516
      %v2519 = vshll.u32 %v2471, 16
      %v2521 = vrot.slane %v2519, 1
      %v2522 = vsel %vm2486, %v2517, %v2521
      %v2524 = vshrl.u32 %v2455, 16
      %v2526 = vshll.u32 %v2455, 16
      %v2528 = vrot.slane %v2526, 1
      %v2529 = vor.u32 %v2524, %v2528
      %v2531 = vshll.u32 %v2472, 16
      %v2533 = vrot.slane %v2531, 1
      %v2534 = vsel %vm2486, %v2529, %v2533
      %v2536 = vshrl.u32 %v2456, 16
      %v2538 = vshll.u32 %v2456, 16
      %v2540 = vrot.slane %v2538, 1
      %v2541 = vor.u32 %v2536, %v2540
      %v2543 = vshll.u32 %v2473, 16
      %v2545 = vrot.slane %v2543, 1
      %v2546 = vsel %vm2486, %v2541, %v2545
      %v2548 = vshrl.u32 %v2457, 16
      %v2550 = vshll.u32 %v2457, 16
      %v2552 = vrot.slane %v2550, 1
      %v2553 = vor.u32 %v2548, %v2552
      %v2555 = vshll.u32 %v2474, 16
      %v2557 = vrot.slane %v2555, 1
      %v2558 = vsel %vm2486, %v2553, %v2557
      %v2560 = vshrl.u32 %v2458, 16
      %v2562 = vshll.u32 %v2458, 16
      %v2564 = vrot.slane %v2562, 1
      %v2565 = vor.u32 %v2560, %v2564
      %v2567 = vshll.u32 %v2475, 16
      %v2569 = vrot.slane %v2567, 1
      %v2570 = vsel %vm2486, %v2565, %v2569
      %v2572 = vshrl.u32 %v2459, 16
      %v2574 = vshll.u32 %v2459, 16
      %v2576 = vrot.slane %v2574, 1
      %v2577 = vor.u32 %v2572, %v2576
      %v2579 = vshll.u32 %v2476, 16
      %v2581 = vrot.slane %v2579, 1
      %v2582 = vsel %vm2486, %v2577, %v2581
      %v2584 = vshrl.u32 %v2460, 16
      %v2586 = vshll.u32 %v2460, 16
      %v2588 = vrot.slane %v2586, 1
      %v2589 = vor.u32 %v2584, %v2588
      %v2591 = vshll.u32 %v2477, 16
      %v2593 = vrot.slane %v2591, 1
      %v2594 = vsel %vm2486, %v2589, %v2593
      %v2596 = vshrl.u32 %v2461, 16
      %v2598 = vshll.u32 %v2461, 16
      %v2600 = vrot.slane %v2598, 1
      %v2601 = vor.u32 %v2596, %v2600
      %v2603 = vshll.u32 %v2478, 16
      %v2605 = vrot.slane %v2603, 1
      %v2606 = vsel %vm2486, %v2601, %v2605
      %v2608 = vshrl.u32 %v2462, 16
      %v2610 = vshll.u32 %v2462, 16
      %v2612 = vrot.slane %v2610, 1
      %v2613 = vor.u32 %v2608, %v2612
      %v2615 = vshll.u32 %v2479, 16
      %v2617 = vrot.slane %v2615, 1
      %v2618 = vsel %vm2486, %v2613, %v2617
      %v2620 = vshrl.u32 %v2463, 16
      %v2622 = vshll.u32 %v2463, 16
      %v2624 = vrot.slane %v2622, 1
      %v2625 = vor.u32 %v2620, %v2624
      %v2627 = vshll.u32 %v2480, 16
      %v2629 = vrot.slane %v2627, 1
      %v2630 = vsel %vm2486, %v2625, %v2629
      %v2632 = vshrl.u32 %v2464, 16
      %v2634 = vshll.u32 %v2464, 16
      %v2636 = vrot.slane %v2634, 1
      %v2637 = vor.u32 %v2632, %v2636
      %v2639 = vshll.u32 %v2481, 16
      %v2641 = vrot.slane %v2639, 1
      %v2642 = vsel %vm2486, %v2637, %v2641
      %v2644 = vshrl.u32 %v2465, 16
      %v2646 = vshll.u32 %v2465, 16
      %v2648 = vrot.slane %v2646, 1
      %v2649 = vor.u32 %v2644, %v2648
      %v2651 = vshll.u32 %v2482, 16
      %v2653 = vrot.slane %v2651, 1
      %v2654 = vsel %vm2486, %v2649, %v2653
      %v2656 = vshrl.u32 %v2466, 16
      %v2658 = vshll.u32 %v2466, 16
      %v2660 = vrot.slane %v2658, 1
      %v2661 = vor.u32 %v2656, %v2660
      %v2663 = vshll.u32 %v2483, 16
      %v2665 = vrot.slane %v2663, 1
      %v2666 = vsel %vm2486, %v2661, %v2665
      %v2668 = vshrl.u32 %v2467, 16
      %v2670 = vshll.u32 %v2467, 16
      %v2672 = vrot.slane %v2670, 1
      %v2673 = vor.u32 %v2668, %v2672
      %v2675 = vshll.u32 %v2484, 16
      %v2677 = vrot.slane %v2675, 1
      %v2678 = vsel %vm2486, %v2673, %v2677
      %vm2711 = vcmask 1046528
      %v2712 = vrot.slane %v2452, 1
      %v2713 = vrot.slane %v2469, 1
      %v2714 = vsel %vm2711, %v2712, %v2713
      %v2715 = vrot.slane %v2453, 1
      %v2716 = vrot.slane %v2470, 1
      %v2717 = vsel %vm2711, %v2715, %v2716
      %v2718 = vrot.slane %v2454, 1
      %v2719 = vrot.slane %v2471, 1
      %v2720 = vsel %vm2711, %v2718, %v2719
      %v2721 = vrot.slane %v2455, 1
      %v2722 = vrot.slane %v2472, 1
      %v2723 = vsel %vm2711, %v2721, %v2722
      %v2724 = vrot.slane %v2456, 1
      %v2725 = vrot.slane %v2473, 1
      %v2726 = vsel %vm2711, %v2724, %v2725
      %v2727 = vrot.slane %v2457, 1
      %v2728 = vrot.slane %v2474, 1
      %v2729 = vsel %vm2711, %v2727, %v2728
      %v2730 = vrot.slane %v2458, 1
      %v2731 = vrot.slane %v2475, 1
      %v2732 = vsel %vm2711, %v2730, %v2731
      %v2733 = vrot.slane %v2459, 1
      %v2734 = vrot.slane %v2476, 1
      %v2735 = vsel %vm2711, %v2733, %v2734
      %v2736 = vrot.slane %v2460, 1
      %v2737 = vrot.slane %v2477, 1
      %v2738 = vsel %vm2711, %v2736, %v2737
      %v2739 = vrot.slane %v2461, 1
      %v2740 = vrot.slane %v2478, 1
      %v2741 = vsel %vm2711, %v2739, %v2740
      %v2742 = vrot.slane %v2462, 1
      %v2743 = vrot.slane %v2479, 1
      %v2744 = vsel %vm2711, %v2742, %v2743
      %v2745 = vrot.slane %v2463, 1
      %v2746 = vrot.slane %v2480, 1
      %v2747 = vsel %vm2711, %v2745, %v2746
      %v2748 = vrot.slane %v2464, 1
      %v2749 = vrot.slane %v2481, 1
      %v2750 = vsel %vm2711, %v2748, %v2749
      %v2751 = vrot.slane %v2465, 1
      %v2752 = vrot.slane %v2482, 1
      %v2753 = vsel %vm2711, %v2751, %v2752
      %v2754 = vrot.slane %v2466, 1
      %v2755 = vrot.slane %v2483, 1
      %v2756 = vsel %vm2711, %v2754, %v2755
      %v2757 = vrot.slane %v2467, 1
      %v2758 = vrot.slane %v2484, 1
      %v2759 = vsel %vm2711, %v2757, %v2758
      %v2761 = vshrl.u32 %v2468, 16
      %v2763 = vshll.u32 %v2468, 16
      %v2765 = vrot.slane %v2763, 1
      %v2766 = vor.u32 %v2761, %v2765
      %v2768 = vshll.u32 %v2485, 16
      %v2770 = vrot.slane %v2768, 1
      %v2771 = vsel %vm2486, %v2766, %v2770
      %v2774 = vrot.slane %v2468, 1
      %v2775 = vrot.slane %v2485, 1
      %v2776 = vsel %vm2711, %v2774, %v2775
      %2777 = vrot.lane.b32.xlu0 %v2498, 8
      %v2778 = vpop.permute.xlu0 %2777
      %2779 = vrot.lane.b32.xlu0 %v2510, 8
      %v2780 = vpop.permute.xlu0 %2779
      %2781 = vrot.lane.b32.xlu0 %v2522, 8
      %v2782 = vpop.permute.xlu0 %2781
      %2783 = vrot.lane.b32.xlu0 %v2534, 8
      %v2784 = vpop.permute.xlu0 %2783
      %2785 = vrot.lane.b32.xlu0 %v2546, 8
      %v2786 = vpop.permute.xlu0 %2785
      %2787 = vrot.lane.b32.xlu0 %v2558, 8
      %v2788 = vpop.permute.xlu0 %2787
      %2789 = vrot.lane.b32.xlu0 %v2570, 8
      %v2790 = vpop.permute.xlu0 %2789
      %2791 = vrot.lane.b32.xlu0 %v2582, 8
      %v2792 = vpop.permute.xlu0 %2791
      %2793 = vrot.lane.b32.xlu0 %v2594, 8
      %v2794 = vpop.permute.xlu0 %2793
      %2795 = vrot.lane.b32.xlu0 %v2606, 8
      %v2796 = vpop.permute.xlu0 %2795
      %2797 = vrot.lane.b32.xlu0 %v2618, 8
      %v2798 = vpop.permute.xlu0 %2797
      %2799 = vrot.lane.b32.xlu0 %v2630, 8
      %v2800 = vpop.permute.xlu0 %2799
      %2801 = vrot.lane.b32.xlu0 %v2642, 8
      %v2802 = vpop.permute.xlu0 %2801
      %2803 = vrot.lane.b32.xlu0 %v2654, 8
      %v2804 = vpop.permute.xlu0 %2803
      %2805 = vrot.lane.b32.xlu0 %v2666, 8
      %v2806 = vpop.permute.xlu0 %2805
      %2807 = vrot.lane.b32.xlu0 %v2678, 8
      %v2808 = vpop.permute.xlu0 %2807
      %2809 = vrot.lane.b32.xlu0 %v2714, 16
      %v2810 = vpop.permute.xlu0 %2809
      %2811 = vrot.lane.b32.xlu0 %v2717, 16
      %v2812 = vpop.permute.xlu0 %2811
      %2813 = vrot.lane.b32.xlu0 %v2720, 16
      %v2814 = vpop.permute.xlu0 %2813
      %2815 = vrot.lane.b32.xlu0 %v2723, 16
      %v2816 = vpop.permute.xlu0 %2815
      %2817 = vrot.lane.b32.xlu0 %v2726, 16
      %v2818 = vpop.permute.xlu0 %2817
      %2819 = vrot.lane.b32.xlu0 %v2729, 16
      %v2820 = vpop.permute.xlu0 %2819
      %2821 = vrot.lane.b32.xlu0 %v2732, 16
      %v2822 = vpop.permute.xlu0 %2821
      %2823 = vrot.lane.b32.xlu0 %v2735, 16
      %v2824 = vpop.permute.xlu0 %2823
      %2825 = vrot.lane.b32.xlu0 %v2738, 16
      %v2826 = vpop.permute.xlu0 %2825
      %2827 = vrot.lane.b32.xlu0 %v2741, 16
      %v2828 = vpop.permute.xlu0 %2827
      %2829 = vrot.lane.b32.xlu0 %v2744, 16
      %v2830 = vpop.permute.xlu0 %2829
      %2831 = vrot.lane.b32.xlu0 %v2747, 16
      %v2832 = vpop.permute.xlu0 %2831
      %2833 = vrot.lane.b32.xlu0 %v2750, 16
      %v2834 = vpop.permute.xlu0 %2833
      %2835 = vrot.lane.b32.xlu0 %v2753, 16
      %v2836 = vpop.permute.xlu0 %2835
      %2837 = vrot.lane.b32.xlu0 %v2756, 16
      %v2838 = vpop.permute.xlu0 %2837
      %2839 = vrot.lane.b32.xlu0 %v2759, 16
      %v2840 = vpop.permute.xlu0 %2839
      %2841 = vrot.lane.b32.xlu0 %v2453, 24
      %v2842 = vpop.permute.xlu0 %2841
      %2843 = vrot.lane.b32.xlu0 %v2454, 24
      %v2844 = vpop.permute.xlu0 %2843
      %2845 = vrot.lane.b32.xlu0 %v2455, 24
      %v2846 = vpop.permute.xlu0 %2845
      %2847 = vrot.lane.b32.xlu0 %v2456, 24
      %v2848 = vpop.permute.xlu0 %2847
      %2849 = vrot.lane.b32.xlu0 %v2457, 24
      %v2850 = vpop.permute.xlu0 %2849
      %2851 = vrot.lane.b32.xlu0 %v2458, 24
      %v2852 = vpop.permute.xlu0 %2851
      %2853 = vrot.lane.b32.xlu0 %v2459, 24
      %v2854 = vpop.permute.xlu0 %2853
      %2855 = vrot.lane.b32.xlu0 %v2460, 24
      %v2856 = vpop.permute.xlu0 %2855
      %2857 = vrot.lane.b32.xlu0 %v2461, 24
      %v2858 = vpop.permute.xlu0 %2857
      %2859 = vrot.lane.b32.xlu0 %v2462, 24
      %v2860 = vpop.permute.xlu0 %2859
      %2861 = vrot.lane.b32.xlu0 %v2463, 24
      %v2862 = vpop.permute.xlu0 %2861
      %2863 = vrot.lane.b32.xlu0 %v2464, 24
      %v2864 = vpop.permute.xlu0 %2863
      %2865 = vrot.lane.b32.xlu0 %v2465, 24
      %v2866 = vpop.permute.xlu0 %2865
      %2867 = vrot.lane.b32.xlu0 %v2466, 24
      %v2868 = vpop.permute.xlu0 %2867
      %2869 = vrot.lane.b32.xlu0 %v2467, 24
      %v2870 = vpop.permute.xlu0 %2869
      %2871 = vrot.lane.b32.xlu0 %v2468, 24
      %v2872 = vpop.permute.xlu0 %2871
      %2873 = vrot.lane.b32.xlu0 %v2510, 32
      %v2874 = vpop.permute.xlu0 %2873
      %2875 = vrot.lane.b32.xlu0 %v2522, 32
      %v2876 = vpop.permute.xlu0 %2875
      %2877 = vrot.lane.b32.xlu0 %v2534, 32
      %v2878 = vpop.permute.xlu0 %2877
      %2879 = vrot.lane.b32.xlu0 %v2546, 32
      %v2880 = vpop.permute.xlu0 %2879
      %2881 = vrot.lane.b32.xlu0 %v2558, 32
      %v2882 = vpop.permute.xlu0 %2881
      %2883 = vrot.lane.b32.xlu0 %v2570, 32
      %v2884 = vpop.permute.xlu0 %2883
      %2885 = vrot.lane.b32.xlu0 %v2582, 32
      %v2886 = vpop.permute.xlu0 %2885
      %2887 = vrot.lane.b32.xlu0 %v2594, 32
      %v2888 = vpop.permute.xlu0 %2887
      %2889 = vrot.lane.b32.xlu0 %v2606, 32
      %v2890 = vpop.permute.xlu0 %2889
      %2891 = vrot.lane.b32.xlu0 %v2618, 32
      %v2892 = vpop.permute.xlu0 %2891
      %2893 = vrot.lane.b32.xlu0 %v2630, 32
      %v2894 = vpop.permute.xlu0 %2893
      %2895 = vrot.lane.b32.xlu0 %v2642, 32
      %v2896 = vpop.permute.xlu0 %2895
      %2897 = vrot.lane.b32.xlu0 %v2654, 32
      %v2898 = vpop.permute.xlu0 %2897
      %2899 = vrot.lane.b32.xlu0 %v2666, 32
      %v2900 = vpop.permute.xlu0 %2899
      %2901 = vrot.lane.b32.xlu0 %v2678, 32
      %v2902 = vpop.permute.xlu0 %2901
      %2903 = vrot.lane.b32.xlu0 %v2771, 32
      %v2904 = vpop.permute.xlu0 %2903
      %2905 = vrot.lane.b32.xlu0 %v2717, 40
      %v2906 = vpop.permute.xlu0 %2905
      %2907 = vrot.lane.b32.xlu0 %v2720, 40
      %v2908 = vpop.permute.xlu0 %2907
      %2909 = vrot.lane.b32.xlu0 %v2723, 40
      %v2910 = vpop.permute.xlu0 %2909
      %2911 = vrot.lane.b32.xlu0 %v2726, 40
      %v2912 = vpop.permute.xlu0 %2911
      %2913 = vrot.lane.b32.xlu0 %v2729, 40
      %v2914 = vpop.permute.xlu0 %2913
      %2915 = vrot.lane.b32.xlu0 %v2732, 40
      %v2916 = vpop.permute.xlu0 %2915
      %2917 = vrot.lane.b32.xlu0 %v2735, 40
      %v2918 = vpop.permute.xlu0 %2917
      %2919 = vrot.lane.b32.xlu0 %v2738, 40
      %v2920 = vpop.permute.xlu0 %2919
      %2921 = vrot.lane.b32.xlu0 %v2741, 40
      %v2922 = vpop.permute.xlu0 %2921
      %2923 = vrot.lane.b32.xlu0 %v2744, 40
      %v2924 = vpop.permute.xlu0 %2923
      %2925 = vrot.lane.b32.xlu0 %v2747, 40
      %v2926 = vpop.permute.xlu0 %2925
      %2927 = vrot.lane.b32.xlu0 %v2750, 40
      %v2928 = vpop.permute.xlu0 %2927
      %2929 = vrot.lane.b32.xlu0 %v2753, 40
      %v2930 = vpop.permute.xlu0 %2929
      %2931 = vrot.lane.b32.xlu0 %v2756, 40
      %v2932 = vpop.permute.xlu0 %2931
      %2933 = vrot.lane.b32.xlu0 %v2759, 40
      %v2934 = vpop.permute.xlu0 %2933
      %2935 = vrot.lane.b32.xlu0 %v2776, 40
      %v2936 = vpop.permute.xlu0 %2935
      %2937 = vrot.lane.b32.xlu0 %v2454, 48
      %v2938 = vpop.permute.xlu0 %2937
      %2939 = vrot.lane.b32.xlu0 %v2455, 48
      %v2940 = vpop.permute.xlu0 %2939
      %2941 = vrot.lane.b32.xlu0 %v2456, 48
      %v2942 = vpop.permute.xlu0 %2941
      %2943 = vrot.lane.b32.xlu0 %v2457, 48
      %v2944 = vpop.permute.xlu0 %2943
      %2945 = vrot.lane.b32.xlu0 %v2458, 48
      %v2946 = vpop.permute.xlu0 %2945
      %2947 = vrot.lane.b32.xlu0 %v2459, 48
      %v2948 = vpop.permute.xlu0 %2947
      %2949 = vrot.lane.b32.xlu0 %v2460, 48
      %v2950 = vpop.permute.xlu0 %2949
      %2951 = vrot.lane.b32.xlu0 %v2461, 48
      %v2952 = vpop.permute.xlu0 %2951
      %2953 = vrot.lane.b32.xlu0 %v2462, 48
      %v2954 = vpop.permute.xlu0 %2953
      %2955 = vrot.lane.b32.xlu0 %v2463, 48
      %v2956 = vpop.permute.xlu0 %2955
      %2957 = vrot.lane.b32.xlu0 %v2464, 48
      %v2958 = vpop.permute.xlu0 %2957
      %2959 = vrot.lane.b32.xlu0 %v2465, 48
      %v2960 = vpop.permute.xlu0 %2959
      %2961 = vrot.lane.b32.xlu0 %v2466, 48
      %v2962 = vpop.permute.xlu0 %2961
      %2963 = vrot.lane.b32.xlu0 %v2467, 48
      %v2964 = vpop.permute.xlu0 %2963
      %2965 = vrot.lane.b32.xlu0 %v2468, 48
      %v2966 = vpop.permute.xlu0 %2965
      %2967 = vrot.lane.b32.xlu0 %v2452, 48
      %v2968 = vpop.permute.xlu0 %2967
      %2969 = vrot.lane.b32.xlu0 %v2522, 56
      %v2970 = vpop.permute.xlu0 %2969
      %2971 = vrot.lane.b32.xlu0 %v2534, 56
      %v2972 = vpop.permute.xlu0 %2971
      %2973 = vrot.lane.b32.xlu0 %v2546, 56
      %v2974 = vpop.permute.xlu0 %2973
      %2975 = vrot.lane.b32.xlu0 %v2558, 56
      %v2976 = vpop.permute.xlu0 %2975
      %2977 = vrot.lane.b32.xlu0 %v2570, 56
      %v2978 = vpop.permute.xlu0 %2977
      %2979 = vrot.lane.b32.xlu0 %v2582, 56
      %v2980 = vpop.permute.xlu0 %2979
      %2981 = vrot.lane.b32.xlu0 %v2594, 56
      %v2982 = vpop.permute.xlu0 %2981
      %2983 = vrot.lane.b32.xlu0 %v2606, 56
      %v2984 = vpop.permute.xlu0 %2983
      %2985 = vrot.lane.b32.xlu0 %v2618, 56
      %v2986 = vpop.permute.xlu0 %2985
      %2987 = vrot.lane.b32.xlu0 %v2630, 56
      %v2988 = vpop.permute.xlu0 %2987
      %2989 = vrot.lane.b32.xlu0 %v2642, 56
      %v2990 = vpop.permute.xlu0 %2989
      %2991 = vrot.lane.b32.xlu0 %v2654, 56
      %v2992 = vpop.permute.xlu0 %2991
      %2993 = vrot.lane.b32.xlu0 %v2666, 56
      %v2994 = vpop.permute.xlu0 %2993
      %2995 = vrot.lane.b32.xlu0 %v2678, 56
      %v2996 = vpop.permute.xlu0 %2995
      %2997 = vrot.lane.b32.xlu0 %v2771, 56
      %v2998 = vpop.permute.xlu0 %2997
      %2999 = vrot.lane.b32.xlu0 %v2498, 56
      %v3000 = vpop.permute.xlu0 %2999
      %3001 = vrot.lane.b32.xlu0 %v2720, 64
      %v3002 = vpop.permute.xlu0 %3001
      %3003 = vrot.lane.b32.xlu0 %v2723, 64
      %v3004 = vpop.permute.xlu0 %3003
      %3005 = vrot.lane.b32.xlu0 %v2726, 64
      %v3006 = vpop.permute.xlu0 %3005
      %3007 = vrot.lane.b32.xlu0 %v2729, 64
      %v3008 = vpop.permute.xlu0 %3007
      %3009 = vrot.lane.b32.xlu0 %v2732, 64
      %v3010 = vpop.permute.xlu0 %3009
      %3011 = vrot.lane.b32.xlu0 %v2735, 64
      %v3012 = vpop.permute.xlu0 %3011
      %3013 = vrot.lane.b32.xlu0 %v2738, 64
      %v3014 = vpop.permute.xlu0 %3013
      %3015 = vrot.lane.b32.xlu0 %v2741, 64
      %v3016 = vpop.permute.xlu0 %3015
      %3017 = vrot.lane.b32.xlu0 %v2744, 64
      %v3018 = vpop.permute.xlu0 %3017
      %3019 = vrot.lane.b32.xlu0 %v2747, 64
      %v3020 = vpop.permute.xlu0 %3019
      %3021 = vrot.lane.b32.xlu0 %v2750, 64
      %v3022 = vpop.permute.xlu0 %3021
      %3023 = vrot.lane.b32.xlu0 %v2753, 64
      %v3024 = vpop.permute.xlu0 %3023
      %3025 = vrot.lane.b32.xlu0 %v2756, 64
      %v3026 = vpop.permute.xlu0 %3025
      %3027 = vrot.lane.b32.xlu0 %v2759, 64
      %v3028 = vpop.permute.xlu0 %3027
      %3029 = vrot.lane.b32.xlu0 %v2776, 64
      %v3030 = vpop.permute.xlu0 %3029
      %3031 = vrot.lane.b32.xlu0 %v2714, 64
      %v3032 = vpop.permute.xlu0 %3031
      %3033 = vrot.lane.b32.xlu0 %v1230, 72
      %v3034 = vpop.permute.xlu0 %3033
      %3035 = vrot.lane.b32.xlu0 %v1231, 72
      %v3036 = vpop.permute.xlu0 %3035
      %3037 = vrot.lane.b32.xlu0 %v1232, 72
      %v3038 = vpop.permute.xlu0 %3037
      %3039 = vrot.lane.b32.xlu0 %v1233, 72
      %v3040 = vpop.permute.xlu0 %3039
      %3041 = vrot.lane.b32.xlu0 %v1234, 72
      %v3042 = vpop.permute.xlu0 %3041
      %3043 = vrot.lane.b32.xlu0 %v1235, 72
      %v3044 = vpop.permute.xlu0 %3043
      %3045 = vrot.lane.b32.xlu0 %v1236, 72
      %v3046 = vpop.permute.xlu0 %3045
      %3047 = vrot.lane.b32.xlu0 %v1237, 72
      %v3048 = vpop.permute.xlu0 %3047
      %3049 = vrot.lane.b32.xlu0 %v1238, 72
      %v3050 = vpop.permute.xlu0 %3049
      %3051 = vrot.lane.b32.xlu0 %v1239, 72
      %v3052 = vpop.permute.xlu0 %3051
      %3053 = vrot.lane.b32.xlu0 %v1240, 72
      %v3054 = vpop.permute.xlu0 %3053
      %3055 = vrot.lane.b32.xlu0 %v1241, 72
      %v3056 = vpop.permute.xlu0 %3055
      %3057 = vrot.lane.b32.xlu0 %v1242, 72
      %v3058 = vpop.permute.xlu0 %3057
      %3059 = vrot.lane.b32.xlu0 %v1243, 72
      %v3060 = vpop.permute.xlu0 %3059
      %3061 = vrot.lane.b32.xlu0 %v1244, 72
      %v3062 = vpop.permute.xlu0 %3061
      %3063 = vrot.lane.b32.xlu0 %v1245, 72
      %v3064 = vpop.permute.xlu0 %3063
      %v3066 = vsel %vm1775, %v2452, %v2778
      %v3068 = vsel %vm1775, %v2453, %v2780
      %v3070 = vsel %vm1775, %v2454, %v2782
      %v3072 = vsel %vm1775, %v2455, %v2784
      %v3074 = vsel %vm1775, %v2456, %v2786
      %v3076 = vsel %vm1775, %v2457, %v2788
      %v3078 = vsel %vm1775, %v2458, %v2790
      %v3080 = vsel %vm1775, %v2459, %v2792
      %v3082 = vsel %vm1775, %v2460, %v2794
      %v3084 = vsel %vm1775, %v2461, %v2796
      %v3086 = vsel %vm1775, %v2462, %v2798
      %v3088 = vsel %vm1775, %v2463, %v2800
      %v3090 = vsel %vm1775, %v2464, %v2802
      %v3092 = vsel %vm1775, %v2465, %v2804
      %v3094 = vsel %vm1775, %v2466, %v2806
      %v3096 = vsel %vm1775, %v2467, %v2808
      %v3098 = vsel %vm1841, %v3066, %v2810
      %v3100 = vsel %vm1841, %v3068, %v2812
      %v3102 = vsel %vm1841, %v3070, %v2814
      %v3104 = vsel %vm1841, %v3072, %v2816
      %v3106 = vsel %vm1841, %v3074, %v2818
      %v3108 = vsel %vm1841, %v3076, %v2820
      %v3110 = vsel %vm1841, %v3078, %v2822
      %v3112 = vsel %vm1841, %v3080, %v2824
      %v3114 = vsel %vm1841, %v3082, %v2826
      %v3116 = vsel %vm1841, %v3084, %v2828
      %v3118 = vsel %vm1841, %v3086, %v2830
      %v3120 = vsel %vm1841, %v3088, %v2832
      %v3122 = vsel %vm1841, %v3090, %v2834
      %v3124 = vsel %vm1841, %v3092, %v2836
      %v3126 = vsel %vm1841, %v3094, %v2838
      %v3128 = vsel %vm1841, %v3096, %v2840
      %v3130 = vsel %vm1907, %v3098, %v2842
      %v3132 = vsel %vm1907, %v3100, %v2844
      %v3134 = vsel %vm1907, %v3102, %v2846
      %v3136 = vsel %vm1907, %v3104, %v2848
      %v3138 = vsel %vm1907, %v3106, %v2850
      %v3140 = vsel %vm1907, %v3108, %v2852
      %v3142 = vsel %vm1907, %v3110, %v2854
      %v3144 = vsel %vm1907, %v3112, %v2856
      %v3146 = vsel %vm1907, %v3114, %v2858
      %v3148 = vsel %vm1907, %v3116, %v2860
      %v3150 = vsel %vm1907, %v3118, %v2862
      %v3152 = vsel %vm1907, %v3120, %v2864
      %v3154 = vsel %vm1907, %v3122, %v2866
      %v3156 = vsel %vm1907, %v3124, %v2868
      %v3158 = vsel %vm1907, %v3126, %v2870
      %v3160 = vsel %vm1907, %v3128, %v2872
      %v3162 = vsel %vm1973, %v3130, %v2874
      %v3164 = vsel %vm1973, %v3132, %v2876
      %v3166 = vsel %vm1973, %v3134, %v2878
      %v3168 = vsel %vm1973, %v3136, %v2880
      %v3170 = vsel %vm1973, %v3138, %v2882
      %v3172 = vsel %vm1973, %v3140, %v2884
      %v3174 = vsel %vm1973, %v3142, %v2886
      %v3176 = vsel %vm1973, %v3144, %v2888
      %v3178 = vsel %vm1973, %v3146, %v2890
      %v3180 = vsel %vm1973, %v3148, %v2892
      %v3182 = vsel %vm1973, %v3150, %v2894
      %v3184 = vsel %vm1973, %v3152, %v2896
      %v3186 = vsel %vm1973, %v3154, %v2898
      %v3188 = vsel %vm1973, %v3156, %v2900
      %v3190 = vsel %vm1973, %v3158, %v2902
      %v3192 = vsel %vm1973, %v3160, %v2904
      %vm3193 = vcmask 326656
      %v3195 = vsel %vm3193, %v3162, %v2906
      %v3197 = vsel %vm3193, %v3164, %v2908
      %v3199 = vsel %vm3193, %v3166, %v2910
      %v3201 = vsel %vm3193, %v3168, %v2912
      %v3203 = vsel %vm3193, %v3170, %v2914
      %v3205 = vsel %vm3193, %v3172, %v2916
      %v3207 = vsel %vm3193, %v3174, %v2918
      %v3209 = vsel %vm3193, %v3176, %v2920
      %v3211 = vsel %vm3193, %v3178, %v2922
      %v3213 = vsel %vm3193, %v3180, %v2924
      %v3215 = vsel %vm3193, %v3182, %v2926
      %v3217 = vsel %vm3193, %v3184, %v2928
      %v3219 = vsel %vm3193, %v3186, %v2930
      %v3221 = vsel %vm3193, %v3188, %v2932
      %v3223 = vsel %vm3193, %v3190, %v2934
      %v3225 = vsel %vm3193, %v3192, %v2936
      %vm3226 = vcmask 392192
      %v3228 = vsel %vm3226, %v3195, %v2938
      %v3230 = vsel %vm3226, %v3197, %v2940
      %v3232 = vsel %vm3226, %v3199, %v2942
      %v3234 = vsel %vm3226, %v3201, %v2944
      %v3236 = vsel %vm3226, %v3203, %v2946
      %v3238 = vsel %vm3226, %v3205, %v2948
      %v3240 = vsel %vm3226, %v3207, %v2950
      %v3242 = vsel %vm3226, %v3209, %v2952
      %v3244 = vsel %vm3226, %v3211, %v2954
      %v3246 = vsel %vm3226, %v3213, %v2956
      %v3248 = vsel %vm3226, %v3215, %v2958
      %v3250 = vsel %vm3226, %v3217, %v2960
      %v3252 = vsel %vm3226, %v3219, %v2962
      %v3254 = vsel %vm3226, %v3221, %v2964
      %v3256 = vsel %vm3226, %v3223, %v2966
      %v3258 = vsel %vm3226, %v3225, %v2968
      %vm3259 = vcmask 457728
      %v3261 = vsel %vm3259, %v3228, %v2970
      %v3263 = vsel %vm3259, %v3230, %v2972
      %v3265 = vsel %vm3259, %v3232, %v2974
      %v3267 = vsel %vm3259, %v3234, %v2976
      %v3269 = vsel %vm3259, %v3236, %v2978
      %v3271 = vsel %vm3259, %v3238, %v2980
      %v3273 = vsel %vm3259, %v3240, %v2982
      %v3275 = vsel %vm3259, %v3242, %v2984
      %v3277 = vsel %vm3259, %v3244, %v2986
      %v3279 = vsel %vm3259, %v3246, %v2988
      %v3281 = vsel %vm3259, %v3248, %v2990
      %v3283 = vsel %vm3259, %v3250, %v2992
      %v3285 = vsel %vm3259, %v3252, %v2994
      %v3287 = vsel %vm3259, %v3254, %v2996
      %v3289 = vsel %vm3259, %v3256, %v2998
      %v3291 = vsel %vm3259, %v3258, %v3000
      %vm3292 = vcmask 523264
      %v3294 = vsel %vm3292, %v3261, %v3002
      %v3296 = vsel %vm3292, %v3263, %v3004
      %v3298 = vsel %vm3292, %v3265, %v3006
      %v3300 = vsel %vm3292, %v3267, %v3008
      %v3302 = vsel %vm3292, %v3269, %v3010
      %v3304 = vsel %vm3292, %v3271, %v3012
      %v3306 = vsel %vm3292, %v3273, %v3014
      %v3308 = vsel %vm3292, %v3275, %v3016
      %v3310 = vsel %vm3292, %v3277, %v3018
      %v3312 = vsel %vm3292, %v3279, %v3020
      %v3314 = vsel %vm3292, %v3281, %v3022
      %v3316 = vsel %vm3292, %v3283, %v3024
      %v3318 = vsel %vm3292, %v3285, %v3026
      %v3320 = vsel %vm3292, %v3287, %v3028
      %v3322 = vsel %vm3292, %v3289, %v3030
      %v3324 = vsel %vm3292, %v3291, %v3032
      %vm3325 = vcmask 588800
      %v3327 = vsel %vm3325, %v3294, %v3034
      %v3329 = vsel %vm3325, %v3296, %v3036
      %v3331 = vsel %vm3325, %v3298, %v3038
      %v3333 = vsel %vm3325, %v3300, %v3040
      %v3335 = vsel %vm3325, %v3302, %v3042
      %v3337 = vsel %vm3325, %v3304, %v3044
      %v3339 = vsel %vm3325, %v3306, %v3046
      %v3341 = vsel %vm3325, %v3308, %v3048
      %v3343 = vsel %vm3325, %v3310, %v3050
      %v3345 = vsel %vm3325, %v3312, %v3052
      %v3347 = vsel %vm3325, %v3314, %v3054
      %v3349 = vsel %vm3325, %v3316, %v3056
      %v3351 = vsel %vm3325, %v3318, %v3058
      %v3353 = vsel %vm3325, %v3320, %v3060
      %v3355 = vsel %vm3325, %v3322, %v3062
      %v3357 = vsel %vm3325, %v3324, %v3064
      %v3358 = vld [vmem:[%s2] sm:$0xf]
      %v3359 = vld [vmem:[%s2 + $0x4] sm:$0xf]
      %v3360 = vld [vmem:[%s2 + $0x8] sm:$0xf]
      %v3361 = vld [vmem:[%s2 + $0xc] sm:$0xf]
      %v3362 = vld [vmem:[%s2 + $0x10] sm:$0xf]
      %v3363 = vld [vmem:[%s2 + $0x14] sm:$0xf]
      %v3364 = vld [vmem:[%s2 + $0x18] sm:$0xf]
      %v3365 = vld [vmem:[%s2 + $0x1c] sm:$0xf]
      %v3366 = vld [vmem:[%s2 + $0x20] sm:$0xf]
      %v3367 = vld [vmem:[%s2 + $0x24] sm:$0x3]
      %v3378 = vunpack.c.l.b16 %v3358
      %v3379 = vunpack.c.l.b16 %v3359
      %v3380 = vunpack.c.l.b16 %v3360
      %v3381 = vunpack.c.l.b16 %v3361
      %v3382 = vunpack.c.l.b16 %v3362
      %v3383 = vunpack.c.l.b16 %v3363
      %v3384 = vunpack.c.l.b16 %v3364
      %v3385 = vunpack.c.l.b16 %v3365
      %v3386 = vunpack.c.l.b16 %v3366
      %v3387 = vunpack.c.l.b16 %v3367
      %v3388 = vpack.c.b16 %v3379, %v3378
      %v3389 = vpack.c.b16 %v3381, %v3380
      %v3390 = vpack.c.b16 %v3383, %v3382
      %v3391 = vpack.c.b16 %v3385, %v3384
      %v3392 = vpack.c.b16 %v3387, %v3386
      %vm3397 = vcmask 621568
      %v3398 = vsel %vm3397, %v3327, 0
      %v3400 = vsel %vm3397, %v3329, 0
      %v3402 = vsel %vm3397, %v3331, 0
      %v3404 = vsel %vm3397, %v3333, 0
      %v3406 = vsel %vm3397, %v3335, 0
      %v3408 = vsel %vm3397, %v3337, 0
      %v3410 = vsel %vm3397, %v3339, 0
      %v3412 = vsel %vm3397, %v3341, 0
      %v3414 = vsel %vm3397, %v3343, 0
      %v3416 = vsel %vm3397, %v3345, 0
      %v3418 = vsel %vm3397, %v3347, 0
      %v3420 = vsel %vm3397, %v3349, 0
      %v3422 = vsel %vm3397, %v3351, 0
      %v3424 = vsel %vm3397, %v3353, 0
      %v3426 = vsel %vm3397, %v3355, 0
      %v3428 = vsel %vm3397, %v3357, 0
      %vm3430 = vcmask 1045504
      %v3432 = vsel %vm3430, %v3392, 0
      %3434 = vmatpush.bf16.msra.mxu0 0
      %3435 = vmatpush.bf16.msra.mxu0 0
      %3436 = vmatpush.bf16.msra.mxu0 0
      %3437 = vmatpush.bf16.msra.mxu0 %v3432
      %3438 = vmatpush.bf16.msra.mxu0 %v3391
      %3439 = vmatpush.bf16.msra.mxu0 %v3390
      %3440 = vmatpush.bf16.msra.mxu0 %v3389
      %3441 = vmatpush.bf16.msra.mxu0 %v3388
      %3442 = vmatmul.bf16.gmra.mxu0 %v3398
      %v3443 = vpop.f32.mrf.mxu0
      %v3444 = vadd.f32 0.0, %v3443
      %v3445 = vpop.f32.mrf.mxu0
      %v3446 = vadd.f32 0.0, %v3445
      %3447 = vmatmul.bf16.gmra.mxu0 %v3400
      %v3448 = vpop.f32.mrf.mxu0
      %v3449 = vadd.f32 0.0, %v3448
      %v3450 = vpop.f32.mrf.mxu0
      %v3451 = vadd.f32 0.0, %v3450
      %3452 = vmatmul.bf16.gmra.mxu0 %v3402
      %v3453 = vpop.f32.mrf.mxu0
      %v3454 = vadd.f32 0.0, %v3453
      %v3455 = vpop.f32.mrf.mxu0
      %v3456 = vadd.f32 0.0, %v3455
      %3457 = vmatmul.bf16.gmra.mxu0 %v3404
      %v3458 = vpop.f32.mrf.mxu0
      %v3459 = vadd.f32 0.0, %v3458
      %v3460 = vpop.f32.mrf.mxu0
      %v3461 = vadd.f32 0.0, %v3460
      %3462 = vmatmul.bf16.gmra.mxu0 %v3406
      %v3463 = vpop.f32.mrf.mxu0
      %v3464 = vadd.f32 0.0, %v3463
      %v3465 = vpop.f32.mrf.mxu0
      %v3466 = vadd.f32 0.0, %v3465
      %3467 = vmatmul.bf16.gmra.mxu0 %v3408
      %v3468 = vpop.f32.mrf.mxu0
      %v3469 = vadd.f32 0.0, %v3468
      %v3470 = vpop.f32.mrf.mxu0
      %v3471 = vadd.f32 0.0, %v3470
      %3472 = vmatmul.bf16.gmra.mxu0 %v3410
      %v3473 = vpop.f32.mrf.mxu0
      %v3474 = vadd.f32 0.0, %v3473
      %v3475 = vpop.f32.mrf.mxu0
      %v3476 = vadd.f32 0.0, %v3475
      %3477 = vmatmul.bf16.gmra.mxu0 %v3412
      %v3478 = vpop.f32.mrf.mxu0
      %v3479 = vadd.f32 0.0, %v3478
      %v3480 = vpop.f32.mrf.mxu0
      %v3481 = vadd.f32 0.0, %v3480
      %3482 = vmatmul.bf16.gmra.mxu0 %v3414
      %v3483 = vpop.f32.mrf.mxu0
      %v3484 = vadd.f32 0.0, %v3483
      %v3485 = vpop.f32.mrf.mxu0
      %v3486 = vadd.f32 0.0, %v3485
      %3487 = vmatmul.bf16.gmra.mxu0 %v3416
      %v3488 = vpop.f32.mrf.mxu0
      %v3489 = vadd.f32 0.0, %v3488
      %v3490 = vpop.f32.mrf.mxu0
      %v3491 = vadd.f32 0.0, %v3490
      %3492 = vmatmul.bf16.gmra.mxu0 %v3418
      %v3493 = vpop.f32.mrf.mxu0
      %v3494 = vadd.f32 0.0, %v3493
      %v3495 = vpop.f32.mrf.mxu0
      %v3496 = vadd.f32 0.0, %v3495
      %3497 = vmatmul.bf16.gmra.mxu0 %v3420
      %v3498 = vpop.f32.mrf.mxu0
      %v3499 = vadd.f32 0.0, %v3498
      %v3500 = vpop.f32.mrf.mxu0
      %v3501 = vadd.f32 0.0, %v3500
      %3502 = vmatmul.bf16.gmra.mxu0 %v3422
      %v3503 = vpop.f32.mrf.mxu0
      %v3504 = vadd.f32 0.0, %v3503
      %v3505 = vpop.f32.mrf.mxu0
      %v3506 = vadd.f32 0.0, %v3505
      %3507 = vmatmul.bf16.gmra.mxu0 %v3424
      %v3508 = vpop.f32.mrf.mxu0
      %v3509 = vadd.f32 0.0, %v3508
      %v3510 = vpop.f32.mrf.mxu0
      %v3511 = vadd.f32 0.0, %v3510
      %3512 = vmatmul.bf16.gmra.mxu0 %v3426
      %v3513 = vpop.f32.mrf.mxu0
      %v3514 = vadd.f32 0.0, %v3513
      %v3515 = vpop.f32.mrf.mxu0
      %v3516 = vadd.f32 0.0, %v3515
      %3517 = vmatmul.bf16.gmra.mxu0 %v3428
      %v3518 = vpop.f32.mrf.mxu0
      %v3519 = vadd.f32 0.0, %v3518
      %v3520 = vpop.f32.mrf.mxu0
      %v3521 = vadd.f32 0.0, %v3520
      %3522 = vdwg.mxu0
      %v3523 = vmax.f32 %v3444, 0.0
      %v3524 = vmax.f32 %v3446, 0.0
      %v3525 = vmax.f32 %v3449, 0.0
      %v3526 = vmax.f32 %v3451, 0.0
      %v3527 = vmax.f32 %v3454, 0.0
      %v3528 = vmax.f32 %v3456, 0.0
      %v3529 = vmax.f32 %v3459, 0.0
      %v3530 = vmax.f32 %v3461, 0.0
      %v3531 = vmax.f32 %v3464, 0.0
      %v3532 = vmax.f32 %v3466, 0.0
      %v3533 = vmax.f32 %v3469, 0.0
      %v3534 = vmax.f32 %v3471, 0.0
      %v3535 = vmax.f32 %v3474, 0.0
      %v3536 = vmax.f32 %v3476, 0.0
      %v3537 = vmax.f32 %v3479, 0.0
      %v3538 = vmax.f32 %v3481, 0.0
      %v3539 = vmax.f32 %v3484, 0.0
      %v3540 = vmax.f32 %v3486, 0.0
      %v3541 = vmax.f32 %v3489, 0.0
      %v3542 = vmax.f32 %v3491, 0.0
      %v3543 = vmax.f32 %v3494, 0.0
      %v3544 = vmax.f32 %v3496, 0.0
      %v3545 = vmax.f32 %v3499, 0.0
      %v3546 = vmax.f32 %v3501, 0.0
      %v3547 = vmax.f32 %v3504, 0.0
      %v3548 = vmax.f32 %v3506, 0.0
      %v3549 = vmax.f32 %v3509, 0.0
      %v3550 = vmax.f32 %v3511, 0.0
      %v3551 = vmax.f32 %v3514, 0.0
      %v3552 = vmax.f32 %v3516, 0.0
      %v3553 = vmax.f32 %v3519, 0.0
      %v3554 = vmax.f32 %v3521, 0.0
      %3555 = vst [vmem:[%s170] sm:$0xff] %v3523
      %3556 = vst [vmem:[%s170 + $0x8] sm:$0xff] %v3524
      %3557 = vst [vmem:[%s170 + $0x10] sm:$0xff] %v3525
      %3558 = vst [vmem:[%s170 + $0x18] sm:$0xff] %v3526
      %3559 = vst [vmem:[%s170 + $0x20] sm:$0xff] %v3527
      %3560 = vst [vmem:[%s170 + $0x28] sm:$0xff] %v3528
      %3561 = vst [vmem:[%s170 + $0x30] sm:$0xff] %v3529
      %3562 = vst [vmem:[%s170 + $0x38] sm:$0xff] %v3530
      %3563 = vst [vmem:[%s170 + $0x40] sm:$0xff] %v3531
      %3564 = vst [vmem:[%s170 + $0x48] sm:$0xff] %v3532
      %3565 = vst [vmem:[%s170 + $0x50] sm:$0xff] %v3533
      %3566 = vst [vmem:[%s170 + $0x58] sm:$0xff] %v3534
      %3567 = vst [vmem:[%s170 + $0x60] sm:$0xff] %v3535
      %3568 = vst [vmem:[%s170 + $0x68] sm:$0xff] %v3536
      %3569 = vst [vmem:[%s170 + $0x70] sm:$0xff] %v3537
      %3570 = vst [vmem:[%s170 + $0x78] sm:$0xff] %v3538
      %3571 = vst [vmem:[%s170 + $0x80] sm:$0xff] %v3539
      %3572 = vst [vmem:[%s170 + $0x88] sm:$0xff] %v3540
      %3573 = vst [vmem:[%s170 + $0x90] sm:$0xff] %v3541
      %3574 = vst [vmem:[%s170 + $0x98] sm:$0xff] %v3542
      %3575 = vst [vmem:[%s170 + $0xa0] sm:$0xff] %v3543
      %3576 = vst [vmem:[%s170 + $0xa8] sm:$0xff] %v3544
      %3577 = vst [vmem:[%s170 + $0xb0] sm:$0xff] %v3545
      %3578 = vst [vmem:[%s170 + $0xb8] sm:$0xff] %v3546
      %3579 = vst [vmem:[%s170 + $0xc0] sm:$0xff] %v3547
      %3580 = vst [vmem:[%s170 + $0xc8] sm:$0xff] %v3548
      %3581 = vst [vmem:[%s170 + $0xd0] sm:$0xff] %v3549
      %3582 = vst [vmem:[%s170 + $0xd8] sm:$0xff] %v3550
      %3583 = vst [vmem:[%s170 + $0xe0] sm:$0xff] %v3551
      %3584 = vst [vmem:[%s170 + $0xe8] sm:$0xff] %v3552
      %3585 = vst [vmem:[%s170 + $0xf0] sm:$0xff] %v3553
      %3586 = vst [vmem:[%s170 + $0xf8] sm:$0xff] %v3554
      %p3587 = scmp.lt.s32.totalorder %s14, 1
      %s3588 = scalar_select %p3587, %s14, 1
      %s3589 = smul.addr %s3588, 32
      %s3590 = smul.addr %s3589, 8
      %s3591 = scalar_lea.vmem %s3, %s3590
      // Predicated region
      $region33: #{basic_block_pallas.1} parent=31 // pred_check
        %p3592 = pneg %p100
      $region34: #{basic_block_pallas.1} parent=31 // pred_check_branch
        %3594 = sbr.rel (%p3592) target = $region36
      $region35: #{basic_block_pallas.1} parent=31 // pred_region
        _
      $region36: #{basic_block_pallas.1} parent=31 // pred_fallthru
        _
    $region32: #{basic_block_pallas.1} parent=5 // pred_fallthru
      _
    %p3595 = scmp.le.s32.totalorder 2, %s9
    // Predicated region
    $region37: #{basic_block_pallas.1} parent=5 // pred_check
      %p3596 = pneg %p3595
    $region38: #{basic_block_pallas.1} parent=5 // pred_check_branch
      %3598 = sbr.rel (%p3596) target = $region40
    $region39: #{basic_block_pallas.1} parent=5 // pred_region
      %s3599 = ssub.s32 %s9, 2
      // Predicated region
      $region41: #{basic_block_pallas.1} parent=39 // pred_check
        %p3600 = pneg %p106
      $region42: #{basic_block_pallas.1} parent=39 // pred_check_branch
        %3602 = sbr.rel (%p3600) target = $region44
      $region43: #{basic_block_pallas.1} parent=39 // pred_region
        %p3603 = scmp.lt.s32.totalorder %s15, 1
        %s3604 = scalar_select %p3603, %s15, 1
        %s3605 = smul.addr %s3604, 32
        %s3606 = smul.addr %s3605, 8
        %s3607 = scalar_lea.vmem %s3, %s3606
      $region44: #{basic_block_pallas.1} parent=39 // pred_fallthru
        _
    $region40: #{basic_block_pallas.1} parent=5 // pred_fallthru
      _
  $region6: #{basic_block_pallas.1} parent=0 // loop_footer
    %s13 = sadd.s32 1, %s9
  $region7: #{basic_block_pallas.1} parent=0 // loop_footer_branch
    %8 = sbr.rel target = $region3
  $region8: #{basic_block_pallas.1} parent=0 // loop_exit
    _

</llo_original>
